<compile_context>
chip_gen: v6e
topology: v6e:2x2x1
jax: 0.10.0
libtpu: 0.0.40
codegen_flags: <defaults>
</compile_context>

<pallas_src>
import functools

import jax
import jax.numpy as jnp
from jax import lax
from jax.experimental import pallas as pl
from jax.experimental.pallas import tpu as pltpu


def _conv_type2_kernel(x_ref, w2a_ref, b2_ref, w3_ref, b1_ref, w2b_ref, b3_ref,
                       wse1_ref, wse2_ref, o_ref, pad_ref, *, H, W, C, C_exp):
    # x_ref: (1, H, W, C) channels-last tile of one sample.
    x = x_ref[0].astype(jnp.float32)               # (H, W, C)
    xs = x.reshape(H * W, C)                       # rows = spatial, lanes = channels

    # conv2a (grouped 1x1 as block-diagonal dense matmul) + folded BN2 + ReLU
    h1 = jnp.dot(xs, w2a_ref[...], preferred_element_type=jnp.float32) + b2_ref[...]
    h1 = jnp.maximum(h1, 0.0)                      # (H*W, C_exp)

    # conv1 (depthwise 3x3, padding=1) + folded BN1 + ReLU
    pad_ref[...] = jnp.zeros_like(pad_ref)
    pad_ref[pl.ds(1, H), pl.ds(1, W), :] = h1.reshape(H, W, C_exp)
    w3 = w3_ref[...]                               # (3, 3, C_exp), BN1 scale folded in
    dw = jnp.zeros((H, W, C_exp), jnp.float32)
    for dy in range(3):
        for dx in range(3):
            dw = dw + (pad_ref[pl.ds(dy, H), pl.ds(dx, W), :]
                       * w3[dy:dy + 1, dx:dx + 1, :])
    dw = jnp.maximum(dw + b1_ref[...], 0.0)        # (H, W, C_exp)

    # conv2b (grouped 1x1 as block-diagonal dense matmul) + folded BN3
    h2 = jnp.dot(dw.reshape(H * W, C_exp), w2b_ref[...],
                 preferred_element_type=jnp.float32) + b3_ref[...]   # (H*W, C)

    # SE block: global average pool -> Linear -> SiLU -> Linear -> Sigmoid
    pooled = jnp.mean(h2, axis=0, keepdims=True)                     # (1, C)
    z = jnp.dot(pooled, wse1_ref[...], preferred_element_type=jnp.float32)
    z = z * jax.nn.sigmoid(z)                                        # SiLU
    gate = jax.nn.sigmoid(
        jnp.dot(z, wse2_ref[...], preferred_element_type=jnp.float32))  # (1, C)

    # residual add + final ReLU
    out = jnp.maximum(xs + h2 * gate, 0.0)
    o_ref[0] = out.reshape(H, W, C).astype(o_ref.dtype)


def _block_diag_1x1(w, groups):
    """(C_out, C_in/groups, 1, 1) grouped 1x1 conv weight -> dense (C_in, C_out)
    block-diagonal matrix for a channels-last matmul."""
    c_out, c_in_per = w.shape[0], w.shape[1]
    out_per = c_out // groups
    dense = jnp.zeros((c_in_per * groups, c_out), w.dtype)
    w2 = w[:, :, 0, 0]                             # (C_out, C_in_per)
    for g in range(groups):
        dense = dense.at[g * c_in_per:(g + 1) * c_in_per,
                         g * out_per:(g + 1) * out_per].set(
            w2[g * out_per:(g + 1) * out_per, :].T)
    return dense


def conv_type2_forward(x_nchw, params, *, cardinality, eps=1e-5):
    """Pallas TPU implementation of ConvType2.forward (inference-mode BN)."""
    (w2a, g2, b2, m2, v2,
     w3, g1, b1, m1, v1,
     w2b, g3, b3, m3, v3,
     wse1, wse2) = params
    N, C, H, W = x_nchw.shape
    C_exp = w2a.shape[0]
    hid = wse1.shape[0]

    # Fold inference-mode BatchNorm (scale into the bias-free conv weights).
    s2 = g2 / jnp.sqrt(v2 + eps); bias2 = b2 - m2 * s2
    s1 = g1 / jnp.sqrt(v1 + eps); bias1 = b1 - m1 * s1
    s3 = g3 / jnp.sqrt(v3 + eps); bias3 = b3 - m3 * s3

    w2a_d = (_block_diag_1x1(w2a, cardinality) * s2[None, :]).astype(jnp.float32)   # (C, C_exp)
    w2b_d = (_block_diag_1x1(w2b, cardinality) * s3[None, :]).astype(jnp.float32)   # (C_exp, C)
    w3_hwc = (jnp.transpose(w3[:, 0, :, :], (1, 2, 0))
              * s1[None, None, :]).astype(jnp.float32)                              # (3, 3, C_exp)

    b2_r = bias2.reshape(1, C_exp).astype(jnp.float32)
    b1_r = bias1.reshape(1, 1, C_exp).astype(jnp.float32)
    b3_r = bias3.reshape(1, C).astype(jnp.float32)
    wse1_t = wse1.T.astype(jnp.float32)            # (C, hid)
    wse2_t = wse2.T.astype(jnp.float32)            # (hid, C)

    # Channels-last (lane-dense channel axis) view of the activation.
    x_nhwc = jnp.transpose(x_nchw, (0, 2, 3, 1))

    kernel = functools.partial(_conv_type2_kernel, H=H, W=W, C=C, C_exp=C_exp)

    itemsize = x_nchw.dtype.itemsize
    flops = int(2 * N * H * W * C_exp * (2 * C + 9))
    bytes_accessed = int(2 * x_nchw.size * itemsize
                         + 4 * (w2a_d.size + w2b_d.size + w3_hwc.size
                                + wse1_t.size + wse2_t.size))

    out_nhwc = pl.pallas_call(
        kernel,
        out_shape=jax.ShapeDtypeStruct((N, H, W, C), x_nchw.dtype),
        grid_spec=pltpu.PrefetchScalarGridSpec(
            num_scalar_prefetch=0,
            grid=(N,),
            in_specs=[
                pl.BlockSpec((1, H, W, C), lambda i: (i, 0, 0, 0)),     # x
                pl.BlockSpec((C, C_exp), lambda i: (0, 0)),             # w2a (BN2 folded)
                pl.BlockSpec((1, C_exp), lambda i: (0, 0)),             # b2
                pl.BlockSpec((3, 3, C_exp), lambda i: (0, 0, 0)),       # w3 (BN1 folded)
                pl.BlockSpec((1, 1, C_exp), lambda i: (0, 0, 0)),       # b1
                pl.BlockSpec((C_exp, C), lambda i: (0, 0)),             # w2b (BN3 folded)
                pl.BlockSpec((1, C), lambda i: (0, 0)),                 # b3
                pl.BlockSpec((C, hid), lambda i: (0, 0)),               # SE linear 1
                pl.BlockSpec((hid, C), lambda i: (0, 0)),               # SE linear 2
            ],
            out_specs=pl.BlockSpec((1, H, W, C), lambda i: (i, 0, 0, 0)),
            scratch_shapes=[pltpu.VMEM((H + 2, W + 2, C_exp), jnp.float32)],
        ),
        compiler_params=pltpu.CompilerParams(
            dimension_semantics=("parallel",),
        ),
        cost_estimate=pl.CostEstimate(
            flops=flops,
            transcendentals=int(N * (C + hid)),
            bytes_accessed=bytes_accessed,
        ),
    )(x_nhwc, w2a_d, b2_r, w3_hwc, b1_r, w2b_d, b3_r, wse1_t, wse2_t)

    return jnp.transpose(out_nhwc, (0, 3, 1, 2))


def conv_type2_ref(x, params, *, cardinality, eps=1e-5):
    """Pure-JAX (XLA) reference of ConvType2.forward with inference-mode BN."""
    (w2a, g2, b2, m2, v2,
     w3, g1, b1, m1, v1,
     w2b, g3, b3, m3, v3,
     wse1, wse2) = params

    def bn(y, gamma, beta, mean, var):
        s = gamma / jnp.sqrt(var + eps)
        return y * s[None, :, None, None] + (beta - mean * s)[None, :, None, None]

    dn = ('NCHW', 'OIHW', 'NCHW')
    y = lax.conv_general_dilated(x, w2a, (1, 1), 'VALID',
                                 dimension_numbers=dn,
                                 feature_group_count=cardinality)
    y = jax.nn.relu(bn(y, g2, b2, m2, v2))
    y = lax.conv_general_dilated(y, w3, (1, 1), ((1, 1), (1, 1)),
                                 dimension_numbers=dn,
                                 feature_group_count=w3.shape[0])
    y = jax.nn.relu(bn(y, g1, b1, m1, v1))
    y = lax.conv_general_dilated(y, w2b, (1, 1), 'VALID',
                                 dimension_numbers=dn,
                                 feature_group_count=cardinality)
    y = bn(y, g3, b3, m3, v3)
    pooled = jnp.mean(y, axis=(2, 3))                     # (N, C)
    z = pooled @ wse1.T
    z = z * jax.nn.sigmoid(z)                             # SiLU
    gate = jax.nn.sigmoid(z @ wse2.T)                     # (N, C)
    y = y * gate[:, :, None, None]
    return jax.nn.relu(x + y)


if __name__ == "__main__":
    key = jax.random.PRNGKey(0)
    N, dim, H, W = 2, 16, 16, 16
    expand_factor, cardinality = 2, 2
    C_exp = dim * expand_factor
    hid = dim // (expand_factor * 4)

    keys = jax.random.split(key, 10)

    def rn(k, shape, scale=0.2):
        return scale * jax.random.normal(k, shape, dtype=jnp.float32)

    x = jax.random.normal(keys[0], (N, dim, H, W), dtype=jnp.float32)

    w2a = rn(keys[1], (C_exp, dim // cardinality, 1, 1))
    w3 = rn(keys[2], (C_exp, 1, 3, 3))
    w2b = rn(keys[3], (dim, C_exp // cardinality, 1, 1))
    wse1 = rn(keys[4], (hid, dim))
    wse2 = rn(keys[5], (dim, hid))

    def bn_params(k, c):
        k1, k2, k3, k4 = jax.random.split(k, 4)
        gamma = 1.0 + 0.1 * jax.random.normal(k1, (c,), dtype=jnp.float32)
        beta = 0.1 * jax.random.normal(k2, (c,), dtype=jnp.float32)
        mean = 0.1 * jax.random.normal(k3, (c,), dtype=jnp.float32)
        var = jnp.abs(jax.random.normal(k4, (c,), dtype=jnp.float32)) + 0.5
        return gamma, beta, mean, var

    g2, b2, m2, v2 = bn_params(keys[6], C_exp)
    g1, b1, m1, v1 = bn_params(keys[7], C_exp)
    g3, b3, m3, v3 = bn_params(keys[8], dim)

    params = (w2a, g2, b2, m2, v2,
              w3, g1, b1, m1, v1,
              w2b, g3, b3, m3, v3,
              wse1, wse2)

    out = conv_type2_forward(x, params, cardinality=cardinality)
    out = jax.block_until_ready(out)

    ref = conv_type2_ref(x, params, cardinality=cardinality)
    assert out.shape == ref.shape and out.dtype == ref.dtype
    max_err = float(jnp.max(jnp.abs(out - ref)))
    assert max_err < 2e-2, f"Pallas ConvType2 mismatch vs reference: {max_err}"

    print("KERNEL_OK")
</pallas_src>

<mosaic_0001>
module attributes {stable_mosaic.version = 11 : i64} {
  func.func @_conv_type2_kernel(%arg0: i32, %arg1: memref<1x16x16x16xf32, #tpu.memory_space<vmem>>, %arg2: memref<16x32xf32, #tpu.memory_space<vmem>>, %arg3: memref<1x32xf32, #tpu.memory_space<vmem>>, %arg4: memref<3x3x32xf32, #tpu.memory_space<vmem>>, %arg5: memref<1x1x32xf32, #tpu.memory_space<vmem>>, %arg6: memref<32x16xf32, #tpu.memory_space<vmem>>, %arg7: memref<1x16xf32, #tpu.memory_space<vmem>>, %arg8: memref<16x2xf32, #tpu.memory_space<vmem>>, %arg9: memref<2x16xf32, #tpu.memory_space<vmem>>, %arg10: memref<1x16x16x16xf32, #tpu.memory_space<vmem>>, %arg11: memref<18x18x32xf32, #tpu.memory_space<vmem>>) attributes {dimension_semantics = [#tpu.dimension_semantics<parallel>], iteration_bounds = array<i64: 2>, scalar_prefetch = 0 : i64, scratch_operands = 1 : i64, tpu.core_type = #tpu.core_type<tc>, window_params = [{transform_indices = @transform_0, window_bounds = array<i64: 1, 16, 16, 16>}, {pipeline_mode = #tpu.pipeline_mode<synchronous>, transform_indices = @transform_1, window_bounds = array<i64: 16, 32>}, {pipeline_mode = #tpu.pipeline_mode<synchronous>, transform_indices = @transform_2, window_bounds = array<i64: 1, 32>}, {pipeline_mode = #tpu.pipeline_mode<synchronous>, transform_indices = @transform_3, window_bounds = array<i64: 3, 3, 32>}, {pipeline_mode = #tpu.pipeline_mode<synchronous>, transform_indices = @transform_4, window_bounds = array<i64: 1, 1, 32>}, {pipeline_mode = #tpu.pipeline_mode<synchronous>, transform_indices = @transform_5, window_bounds = array<i64: 32, 16>}, {pipeline_mode = #tpu.pipeline_mode<synchronous>, transform_indices = @transform_6, window_bounds = array<i64: 1, 16>}, {pipeline_mode = #tpu.pipeline_mode<synchronous>, transform_indices = @transform_7, window_bounds = array<i64: 16, 2>}, {pipeline_mode = #tpu.pipeline_mode<synchronous>, transform_indices = @transform_8, window_bounds = array<i64: 2, 16>}, {transform_indices = @transform_9, window_bounds = array<i64: 1, 16, 16, 16>}]} {
    %c0 = arith.constant 0 : index
    %c0_0 = arith.constant 0 : index
    %c0_1 = arith.constant 0 : index
    %c0_2 = arith.constant 0 : index
    %0 = vector.load %arg1[%c0, %c0_0, %c0_1, %c0_2] : memref<1x16x16x16xf32, #tpu.memory_space<vmem>>, vector<1x16x16x16xf32>
    %1 = vector.shape_cast %0 : vector<1x16x16x16xf32> to vector<16x16x16xf32>
    %2 = vector.shape_cast %1 : vector<16x16x16xf32> to vector<256x16xf32>
    %c0_3 = arith.constant 0 : index
    %c0_4 = arith.constant 0 : index
    %3 = vector.load %arg2[%c0_3, %c0_4] : memref<16x32xf32, #tpu.memory_space<vmem>>, vector<16x32xf32>
    %cst = arith.constant dense<0.000000e+00> : vector<256x32xf32>
    %4 = tpu.matmul %2, %3, %cst {dimension_numbers = #tpu.dot_dimension_numbers<[1], [0], [0], [1], [0, 0, 1, 1], [], []>} : vector<256x16xf32>, vector<16x32xf32>, vector<256x32xf32> -> vector<256x32xf32>
    %c0_5 = arith.constant 0 : index
    %c0_6 = arith.constant 0 : index
    %5 = vector.load %arg3[%c0_5, %c0_6] : memref<1x32xf32, #tpu.memory_space<vmem>>, vector<1x32xf32>
    %6 = vector.broadcast %5 : vector<1x32xf32> to vector<256x32xf32>
    %7 = arith.addf %4, %6 : vector<256x32xf32>
    %cst_7 = arith.constant 0.000000e+00 : f32
    %8 = vector.broadcast %cst_7 : f32 to vector<256x32xf32>
    %9 = arith.maximumf %7, %8 : vector<256x32xf32>
    %cst_8 = arith.constant 0.000000e+00 : f32
    %10 = vector.broadcast %cst_8 : f32 to vector<18x18x32xf32>
    %c0_9 = arith.constant 0 : index
    %c0_10 = arith.constant 0 : index
    %c0_11 = arith.constant 0 : index
    %11 = vector.load %arg11[%c0_9, %c0_10, %c0_11] : memref<18x18x32xf32, #tpu.memory_space<vmem>>, vector<18x18x32xf32>
    tpu.vector_store %arg11[%c0_9, %c0_10, %c0_11], %10 {strides = array<i32>} : memref<18x18x32xf32, #tpu.memory_space<vmem>>, vector<18x18x32xf32>,
    %12 = vector.shape_cast %9 : vector<256x32xf32> to vector<16x16x32xf32>
    %c1 = arith.constant 1 : index
    %c1_12 = arith.constant 1 : index
    %c0_13 = arith.constant 0 : index
    %13 = vector.load %arg11[%c1, %c1_12, %c0_13] : memref<18x18x32xf32, #tpu.memory_space<vmem>>, vector<16x16x32xf32>
    tpu.vector_store %arg11[%c1, %c1_12, %c0_13], %12 {strides = array<i32>} : memref<18x18x32xf32, #tpu.memory_space<vmem>>, vector<16x16x32xf32>,
    %c0_14 = arith.constant 0 : index
    %c0_15 = arith.constant 0 : index
    %c0_16 = arith.constant 0 : index
    %14 = vector.load %arg4[%c0_14, %c0_15, %c0_16] : memref<3x3x32xf32, #tpu.memory_space<vmem>>, vector<3x3x32xf32>
    %cst_17 = arith.constant 0.000000e+00 : f32
    %15 = vector.broadcast %cst_17 : f32 to vector<16x16x32xf32>
    %c0_18 = arith.constant 0 : index
    %c0_19 = arith.constant 0 : index
    %c0_20 = arith.constant 0 : index
    %16 = vector.load %arg11[%c0_18, %c0_19, %c0_20] : memref<18x18x32xf32, #tpu.memory_space<vmem>>, vector<16x16x32xf32>
    %17 = vector.extract_strided_slice %14 {offsets = [0, 0, 0], sizes = [1, 1, 32], strides = [1, 1, 1]} : vector<3x3x32xf32> to vector<1x1x32xf32>
    %18 = vector.broadcast %17 : vector<1x1x32xf32> to vector<16x16x32xf32>
    %19 = arith.mulf %16, %18 : vector<16x16x32xf32>
    %20 = arith.addf %15, %19 : vector<16x16x32xf32>
    %c0_21 = arith.constant 0 : index
    %c1_22 = arith.constant 1 : index
    %c0_23 = arith.constant 0 : index
    %21 = vector.load %arg11[%c0_21, %c1_22, %c0_23] : memref<18x18x32xf32, #tpu.memory_space<vmem>>, vector<16x16x32xf32>
    %22 = vector.extract_strided_slice %14 {offsets = [0, 1, 0], sizes = [1, 1, 32], strides = [1, 1, 1]} : vector<3x3x32xf32> to vector<1x1x32xf32>
    %23 = vector.broadcast %22 : vector<1x1x32xf32> to vector<16x16x32xf32>
    %24 = arith.mulf %21, %23 : vector<16x16x32xf32>
    %25 = arith.addf %20, %24 : vector<16x16x32xf32>
    %c0_24 = arith.constant 0 : index
    %c2 = arith.constant 2 : index
    %c0_25 = arith.constant 0 : index
    %26 = vector.load %arg11[%c0_24, %c2, %c0_25] : memref<18x18x32xf32, #tpu.memory_space<vmem>>, vector<16x16x32xf32>
    %27 = vector.extract_strided_slice %14 {offsets = [0, 2, 0], sizes = [1, 1, 32], strides = [1, 1, 1]} : vector<3x3x32xf32> to vector<1x1x32xf32>
    %28 = vector.broadcast %27 : vector<1x1x32xf32> to vector<16x16x32xf32>
    %29 = arith.mulf %26, %28 : vector<16x16x32xf32>
    %30 = arith.addf %25, %29 : vector<16x16x32xf32>
    %c1_26 = arith.constant 1 : index
    %c0_27 = arith.constant 0 : index
    %c0_28 = arith.constant 0 : index
    %31 = vector.load %arg11[%c1_26, %c0_27, %c0_28] : memref<18x18x32xf32, #tpu.memory_space<vmem>>, vector<16x16x32xf32>
    %32 = vector.extract_strided_slice %14 {offsets = [1, 0, 0], sizes = [1, 1, 32], strides = [1, 1, 1]} : vector<3x3x32xf32> to vector<1x1x32xf32>
    %33 = vector.broadcast %32 : vector<1x1x32xf32> to vector<16x16x32xf32>
    %34 = arith.mulf %31, %33 : vector<16x16x32xf32>
    %35 = arith.addf %30, %34 : vector<16x16x32xf32>
    %c1_29 = arith.constant 1 : index
    %c1_30 = arith.constant 1 : index
    %c0_31 = arith.constant 0 : index
    %36 = vector.load %arg11[%c1_29, %c1_30, %c0_31] : memref<18x18x32xf32, #tpu.memory_space<vmem>>, vector<16x16x32xf32>
    %37 = vector.extract_strided_slice %14 {offsets = [1, 1, 0], sizes = [1, 1, 32], strides = [1, 1, 1]} : vector<3x3x32xf32> to vector<1x1x32xf32>
    %38 = vector.broadcast %37 : vector<1x1x32xf32> to vector<16x16x32xf32>
    %39 = arith.mulf %36, %38 : vector<16x16x32xf32>
    %40 = arith.addf %35, %39 : vector<16x16x32xf32>
    %c1_32 = arith.constant 1 : index
    %c2_33 = arith.constant 2 : index
    %c0_34 = arith.constant 0 : index
    %41 = vector.load %arg11[%c1_32, %c2_33, %c0_34] : memref<18x18x32xf32, #tpu.memory_space<vmem>>, vector<16x16x32xf32>
    %42 = vector.extract_strided_slice %14 {offsets = [1, 2, 0], sizes = [1, 1, 32], strides = [1, 1, 1]} : vector<3x3x32xf32> to vector<1x1x32xf32>
    %43 = vector.broadcast %42 : vector<1x1x32xf32> to vector<16x16x32xf32>
    %44 = arith.mulf %41, %43 : vector<16x16x32xf32>
    %45 = arith.addf %40, %44 : vector<16x16x32xf32>
    %c2_35 = arith.constant 2 : index
    %c0_36 = arith.constant 0 : index
    %c0_37 = arith.constant 0 : index
    %46 = vector.load %arg11[%c2_35, %c0_36, %c0_37] : memref<18x18x32xf32, #tpu.memory_space<vmem>>, vector<16x16x32xf32>
    %47 = vector.extract_strided_slice %14 {offsets = [2, 0, 0], sizes = [1, 1, 32], strides = [1, 1, 1]} : vector<3x3x32xf32> to vector<1x1x32xf32>
    %48 = vector.broadcast %47 : vector<1x1x32xf32> to vector<16x16x32xf32>
    %49 = arith.mulf %46, %48 : vector<16x16x32xf32>
    %50 = arith.addf %45, %49 : vector<16x16x32xf32>
    %c2_38 = arith.constant 2 : index
    %c1_39 = arith.constant 1 : index
    %c0_40 = arith.constant 0 : index
    %51 = vector.load %arg11[%c2_38, %c1_39, %c0_40] : memref<18x18x32xf32, #tpu.memory_space<vmem>>, vector<16x16x32xf32>
    %52 = vector.extract_strided_slice %14 {offsets = [2, 1, 0], sizes = [1, 1, 32], strides = [1, 1, 1]} : vector<3x3x32xf32> to vector<1x1x32xf32>
    %53 = vector.broadcast %52 : vector<1x1x32xf32> to vector<16x16x32xf32>
    %54 = arith.mulf %51, %53 : vector<16x16x32xf32>
    %55 = arith.addf %50, %54 : vector<16x16x32xf32>
    %c2_41 = arith.constant 2 : index
    %c2_42 = arith.constant 2 : index
    %c0_43 = arith.constant 0 : index
    %56 = vector.load %arg11[%c2_41, %c2_42, %c0_43] : memref<18x18x32xf32, #tpu.memory_space<vmem>>, vector<16x16x32xf32>
    %57 = vector.extract_strided_slice %14 {offsets = [2, 2, 0], sizes = [1, 1, 32], strides = [1, 1, 1]} : vector<3x3x32xf32> to vector<1x1x32xf32>
    %58 = vector.broadcast %57 : vector<1x1x32xf32> to vector<16x16x32xf32>
    %59 = arith.mulf %56, %58 : vector<16x16x32xf32>
    %60 = arith.addf %55, %59 : vector<16x16x32xf32>
    %c0_44 = arith.constant 0 : index
    %c0_45 = arith.constant 0 : index
    %c0_46 = arith.constant 0 : index
    %61 = vector.load %arg5[%c0_44, %c0_45, %c0_46] : memref<1x1x32xf32, #tpu.memory_space<vmem>>, vector<1x1x32xf32>
    %62 = vector.broadcast %61 : vector<1x1x32xf32> to vector<16x16x32xf32>
    %63 = arith.addf %60, %62 : vector<16x16x32xf32>
    %cst_47 = arith.constant 0.000000e+00 : f32
    %64 = vector.broadcast %cst_47 : f32 to vector<16x16x32xf32>
    %65 = arith.maximumf %63, %64 : vector<16x16x32xf32>
    %66 = vector.shape_cast %65 : vector<16x16x32xf32> to vector<256x32xf32>
    %c0_48 = arith.constant 0 : index
    %c0_49 = arith.constant 0 : index
    %67 = vector.load %arg6[%c0_48, %c0_49] : memref<32x16xf32, #tpu.memory_space<vmem>>, vector<32x16xf32>
    %cst_50 = arith.constant dense<0.000000e+00> : vector<256x16xf32>
    %68 = tpu.matmul %66, %67, %cst_50 {dimension_numbers = #tpu.dot_dimension_numbers<[1], [0], [0], [1], [0, 0, 1, 1], [], []>} : vector<256x32xf32>, vector<32x16xf32>, vector<256x16xf32> -> vector<256x16xf32>
    %c0_51 = arith.constant 0 : index
    %c0_52 = arith.constant 0 : index
    %69 = vector.load %arg7[%c0_51, %c0_52] : memref<1x16xf32, #tpu.memory_space<vmem>>, vector<1x16xf32>
    %70 = vector.broadcast %69 : vector<1x16xf32> to vector<256x16xf32>
    %71 = arith.addf %68, %70 : vector<256x16xf32>
    %cst_53 = arith.constant dense<0.000000e+00> : vector<16xf32>
    %72 = vector.multi_reduction <add>, %71, %cst_53 [0] : vector<256x16xf32> to vector<16xf32>
    %73 = vector.shape_cast %72 : vector<16xf32> to vector<1x16xf32>
    %cst_54 = arith.constant 2.560000e+02 : f32
    %74 = vector.broadcast %cst_54 : f32 to vector<1x16xf32>
    %75 = arith.divf %73, %74 : vector<1x16xf32>
    %c0_55 = arith.constant 0 : index
    %c0_56 = arith.constant 0 : index
    %76 = vector.load %arg8[%c0_55, %c0_56] : memref<16x2xf32, #tpu.memory_space<vmem>>, vector<16x2xf32>
    %cst_57 = arith.constant dense<0.000000e+00> : vector<1x2xf32>
    %77 = tpu.matmul %75, %76, %cst_57 {dimension_numbers = #tpu.dot_dimension_numbers<[1], [0], [0], [1], [0, 0, 1, 1], [], []>} : vector<1x16xf32>, vector<16x2xf32>, vector<1x2xf32> -> vector<1x2xf32>
    %78 = arith.negf %77 : vector<1x2xf32>
    %79 = math.exp %78 : vector<1x2xf32>
    %cst_58 = arith.constant 1.000000e+00 : f32
    %80 = vector.broadcast %cst_58 : f32 to vector<1x2xf32>
    %81 = arith.addf %80, %79 : vector<1x2xf32>
    %82 = arith.divf %80, %81 : vector<1x2xf32>
    %83 = arith.mulf %77, %82 : vector<1x2xf32>
    %c0_59 = arith.constant 0 : index
    %c0_60 = arith.constant 0 : index
    %84 = vector.load %arg9[%c0_59, %c0_60] : memref<2x16xf32, #tpu.memory_space<vmem>>, vector<2x16xf32>
    %cst_61 = arith.constant dense<0.000000e+00> : vector<1x16xf32>
    %85 = tpu.matmul %83, %84, %cst_61 {dimension_numbers = #tpu.dot_dimension_numbers<[1], [0], [0], [1], [0, 0, 1, 1], [], []>} : vector<1x2xf32>, vector<2x16xf32>, vector<1x16xf32> -> vector<1x16xf32>
    %86 = arith.negf %85 : vector<1x16xf32>
    %87 = math.exp %86 : vector<1x16xf32>
    %cst_62 = arith.constant 1.000000e+00 : f32
    %88 = vector.broadcast %cst_62 : f32 to vector<1x16xf32>
    %89 = arith.addf %88, %87 : vector<1x16xf32>
    %90 = arith.divf %88, %89 : vector<1x16xf32>
    %91 = vector.broadcast %90 : vector<1x16xf32> to vector<256x16xf32>
    %92 = arith.mulf %71, %91 : vector<256x16xf32>
    %93 = arith.addf %2, %92 : vector<256x16xf32>
    %cst_63 = arith.constant 0.000000e+00 : f32
    %94 = vector.broadcast %cst_63 : f32 to vector<256x16xf32>
    %95 = arith.maximumf %93, %94 : vector<256x16xf32>
    %96 = vector.shape_cast %95 : vector<256x16xf32> to vector<16x16x16xf32>
    %c0_64 = arith.constant 0 : index
    %c0_65 = arith.constant 0 : index
    %c0_66 = arith.constant 0 : index
    %c0_67 = arith.constant 0 : index
    %97 = vector.load %arg10[%c0_64, %c0_65, %c0_66, %c0_67] : memref<1x16x16x16xf32, #tpu.memory_space<vmem>>, vector<1x16x16x16xf32>
    %98 = vector.shape_cast %97 : vector<1x16x16x16xf32> to vector<16x16x16xf32>
    %99 = vector.shape_cast %96 : vector<16x16x16xf32> to vector<1x16x16x16xf32>
    tpu.vector_store %arg10[%c0_64, %c0_65, %c0_66, %c0_67], %99 {strides = array<i32>} : memref<1x16x16x16xf32, #tpu.memory_space<vmem>>, vector<1x16x16x16xf32>,
    return
  }
  func.func @transform_0(%arg0: i32) -> (i32, i32, i32, i32) {
    %c0_i32 = arith.constant 0 : i32
    %c0_i32_0 = arith.constant 0 : i32
    %c0_i32_1 = arith.constant 0 : i32
    %c0_i32_2 = arith.constant 0 : i32
    return %arg0, %c0_i32, %c0_i32_0, %c0_i32_1 : i32, i32, i32, i32
  }
  func.func @transform_1(%arg0: i32) -> (i32, i32) {
    %c0_i32 = arith.constant 0 : i32
    %c0_i32_0 = arith.constant 0 : i32
    %c0_i32_1 = arith.constant 0 : i32
    return %c0_i32, %c0_i32_0 : i32, i32
  }
  func.func @transform_2(%arg0: i32) -> (i32, i32) {
    %c0_i32 = arith.constant 0 : i32
    %c0_i32_0 = arith.constant 0 : i32
    %c0_i32_1 = arith.constant 0 : i32
    return %c0_i32, %c0_i32_0 : i32, i32
  }
  func.func @transform_3(%arg0: i32) -> (i32, i32, i32) {
    %c0_i32 = arith.constant 0 : i32
    %c0_i32_0 = arith.constant 0 : i32
    %c0_i32_1 = arith.constant 0 : i32
    %c0_i32_2 = arith.constant 0 : i32
    return %c0_i32, %c0_i32_0, %c0_i32_1 : i32, i32, i32
  }
  func.func @transform_4(%arg0: i32) -> (i32, i32, i32) {
    %c0_i32 = arith.constant 0 : i32
    %c0_i32_0 = arith.constant 0 : i32
    %c0_i32_1 = arith.constant 0 : i32
    %c0_i32_2 = arith.constant 0 : i32
    return %c0_i32, %c0_i32_0, %c0_i32_1 : i32, i32, i32
  }
  func.func @transform_5(%arg0: i32) -> (i32, i32) {
    %c0_i32 = arith.constant 0 : i32
    %c0_i32_0 = arith.constant 0 : i32
    %c0_i32_1 = arith.constant 0 : i32
    return %c0_i32, %c0_i32_0 : i32, i32
  }
  func.func @transform_6(%arg0: i32) -> (i32, i32) {
    %c0_i32 = arith.constant 0 : i32
    %c0_i32_0 = arith.constant 0 : i32
    %c0_i32_1 = arith.constant 0 : i32
    return %c0_i32, %c0_i32_0 : i32, i32
  }
  func.func @transform_7(%arg0: i32) -> (i32, i32) {
    %c0_i32 = arith.constant 0 : i32
    %c0_i32_0 = arith.constant 0 : i32
    %c0_i32_1 = arith.constant 0 : i32
    return %c0_i32, %c0_i32_0 : i32, i32
  }
  func.func @transform_8(%arg0: i32) -> (i32, i32) {
    %c0_i32 = arith.constant 0 : i32
    %c0_i32_0 = arith.constant 0 : i32
    %c0_i32_1 = arith.constant 0 : i32
    return %c0_i32, %c0_i32_0 : i32, i32
  }
  func.func @transform_9(%arg0: i32) -> (i32, i32, i32, i32) {
    %c0_i32 = arith.constant 0 : i32
    %c0_i32_0 = arith.constant 0 : i32
    %c0_i32_1 = arith.constant 0 : i32
    %c0_i32_2 = arith.constant 0 : i32
    return %arg0, %c0_i32, %c0_i32_0, %c0_i32_1 : i32, i32, i32, i32
  }
}

</mosaic_0001>

<llo_original>
// kernel: tpu_custom_call.1
$region0: #{tpu_custom_call.1}
  #allocation0 [shape = 'u32[]', space=smem, size = 0x4, offset = 0x4, fixed_abs, tag = 'smem constant byte address 0x4 - core index']
  #allocation1 [shape = 'u32[144,128]{1,0:T(1,128)}', space=vmem, size = 0x12000, scoped, tag = 'internal scratch']
  #allocation2 [shape = 'f32[18,18,32]{2,1,0:T(8,128)}', space=vmem, size = 0x36000, scoped, tag = 'scratch operand']
  %s0 = inlined_call_operand.hbm [shape: f32[2,16,16,16], index: 0, kind: input, shape index: {}]
  %s1 = inlined_call_operand.vmem [shape: f32[16,32], index: 1, kind: input, shape index: {}]
  %s2 = inlined_call_operand.vmem [shape: f32[1,32], index: 2, kind: input, shape index: {}]
  %s3 = inlined_call_operand.vmem [shape: f32[3,3,32], index: 3, kind: input, shape index: {}]
  %s4 = inlined_call_operand.vmem [shape: f32[1,1,32], index: 4, kind: input, shape index: {}]
  %s5 = inlined_call_operand.vmem [shape: f32[32,16], index: 5, kind: input, shape index: {}]
  %s6 = inlined_call_operand.vmem [shape: f32[1,16], index: 6, kind: input, shape index: {}]
  %s7 = inlined_call_operand.vmem [shape: f32[16,2], index: 7, kind: input, shape index: {}]
  %s8 = inlined_call_operand.vmem [shape: f32[2,16], index: 8, kind: input, shape index: {}]
  %s9 = inlined_call_operand.hbm [shape: f32[2,16,16,16], index: 9, kind: output, shape index: {}]
  %s10 = sld [smem:[#allocation0]]
  $region73: #{tpu_custom_call.1} parent=0
    _
  %s12 = ssub.s32 1, %s10
  %s13 = scalar_select 0, %s12, %s10
  $region1: #{tpu_custom_call.1} parent=0
    #allocation3 [shape = 'u8[262144]{0}', space=vmem, size = 0x40000, scoped, tag = 'input window, operand 0']
    #allocation4 [shape = 's32[2]{0}', space=sflag, size = 0x8, scoped, tag = 'scoped memory for tpu_custom_call.1']
    #allocation5 [shape = 's32[2]{0}', space=sflag, size = 0x8, scoped, tag = 'scoped memory for tpu_custom_call.1']
    #allocation6 [shape = 'u8[262144]{0}', space=vmem, size = 0x40000, scoped, tag = 'output window, operand 0']
    %14 = vsyncpa [#allocation4], 0
    %s15 = scalar_lea.sflag [#allocation4], 1
    %16 = vsyncpa %s15, 0
    %17 = vsyncpa [#allocation5], 0
    %s18 = scalar_lea.sflag [#allocation5], 1
    %19 = vsyncpa %s18, 0
    loop: start=0, step=1, limit=4
    $region2: #{tpu_custom_call.1} parent=1 // loop_pre_header
      _
    $region3: #{tpu_custom_call.1} parent=1 // loop_header
      %s21 = sphi 0, %s25
      %p22 = scmp.ge.s32.totalorder %s21, 4
      %s31 = sphi 0, %s33
      %s34 = sphi 0, %s31
      %s35 = sphi 0, %s34
      %s51 = sphi 0, %s35
      %s55 = sphi 0, %s55
      %s57 = sphi 0, %s55
      %s58 = sphi 0, %s57
      %s72 = sphi 0, %s58
      %s76 = sphi 0, %s76
      %s78 = sphi 0, %s76
      %s79 = sphi 0, %s78
      %s93 = sphi 0, %s79
      %s97 = sphi 0, %s97
      %s99 = sphi 0, %s97
      %s100 = sphi 0, %s99
      %s114 = sphi 0, %s100
      %s118 = sphi 0, %s118
      %s120 = sphi 0, %s118
      %s121 = sphi 0, %s120
      %s135 = sphi 0, %s121
      %s139 = sphi 0, %s139
      %s141 = sphi 0, %s139
      %s142 = sphi 0, %s141
      %s156 = sphi 0, %s142
      %s160 = sphi 0, %s160
      %s162 = sphi 0, %s160
      %s163 = sphi 0, %s162
      %s177 = sphi 0, %s163
      %s181 = sphi 0, %s181
      %s183 = sphi 0, %s181
      %s184 = sphi 0, %s183
      %s198 = sphi 0, %s184
      %s202 = sphi 0, %s202
      %s204 = sphi 0, %s202
      %s205 = sphi 0, %s204
      %s219 = sphi 0, %s205
      %s225 = sphi 0, %s227
      %s228 = sphi 0, %s225
      %s229 = sphi 0, %s228
      %s245 = sphi 0, %s229
    $region4: #{tpu_custom_call.1} parent=1 // loop_header_branch
      %24 = sbr.rel (%p22) target = $region8
    $region5: #{tpu_custom_call.1} parent=1 // loop_body
      %s26 = ssub.s32 %s21, 1
      %s27 = ssub.s32 %s21, 2
      %s28 = sadd.s32 %s21, 1
      %s29 = ssub.s32 %s21, %s28
      %p30 = scmp.eq.s32.totalorder %s29, 0
      %s32 = sadd.s32 %s31, 1
      %s33 = scalar_select %p30, %s31, %s32
      %p36 = pneg %p30
      %p37 = scmp.eq.s32.totalorder %s21, 1
      %p38 = por %p36, %p37
      %p39 = scmp.ne.s32.totalorder %s31, %s34
      %p40 = scmp.eq.s32.totalorder %s21, 0
      %p41 = por %p39, %p40
      %p42 = scmp.ne.s32.totalorder %s31, %s34
      %p43 = scmp.eq.s32.totalorder %s26, 1
      %p44 = por %p42, %p43
      %p45 = scmp.ne.s32.totalorder %s34, %s35
      %p46 = scmp.eq.s32.totalorder %s26, 0
      %p47 = por %p45, %p46
      %p48 = scmp.ne.s32.totalorder %s34, %s35
      %p49 = scmp.eq.s32.totalorder %s27, 1
      %p50 = por %p48, %p49
      %p52 = scmp.ne.s32.totalorder %s35, %s51
      %p53 = scmp.eq.s32.totalorder %s27, 0
      %p54 = por %p52, %p53
      %s56 = sadd.s32 %s55, 1
      %p59 = scmp.eq.s32.totalorder %s21, 1
      %p60 = scmp.ne.s32.totalorder %s55, %s57
      %p61 = scmp.eq.s32.totalorder %s21, 0
      %p62 = por %p60, %p61
      %p63 = scmp.ne.s32.totalorder %s55, %s57
      %p64 = scmp.eq.s32.totalorder %s26, 1
      %p65 = por %p63, %p64
      %p66 = scmp.ne.s32.totalorder %s57, %s58
      %p67 = scmp.eq.s32.totalorder %s26, 0
      %p68 = por %p66, %p67
      %p69 = scmp.ne.s32.totalorder %s57, %s58
      %p70 = scmp.eq.s32.totalorder %s27, 1
      %p71 = por %p69, %p70
      %p73 = scmp.ne.s32.totalorder %s58, %s72
      %p74 = scmp.eq.s32.totalorder %s27, 0
      %p75 = por %p73, %p74
      %s77 = sadd.s32 %s76, 1
      %p80 = scmp.eq.s32.totalorder %s21, 1
      %p81 = scmp.ne.s32.totalorder %s76, %s78
      %p82 = scmp.eq.s32.totalorder %s21, 0
      %p83 = por %p81, %p82
      %p84 = scmp.ne.s32.totalorder %s76, %s78
      %p85 = scmp.eq.s32.totalorder %s26, 1
      %p86 = por %p84, %p85
      %p87 = scmp.ne.s32.totalorder %s78, %s79
      %p88 = scmp.eq.s32.totalorder %s26, 0
      %p89 = por %p87, %p88
      %p90 = scmp.ne.s32.totalorder %s78, %s79
      %p91 = scmp.eq.s32.totalorder %s27, 1
      %p92 = por %p90, %p91
      %p94 = scmp.ne.s32.totalorder %s79, %s93
      %p95 = scmp.eq.s32.totalorder %s27, 0
      %p96 = por %p94, %p95
      %s98 = sadd.s32 %s97, 1
      %p101 = scmp.eq.s32.totalorder %s21, 1
      %p102 = scmp.ne.s32.totalorder %s97, %s99
      %p103 = scmp.eq.s32.totalorder %s21, 0
      %p104 = por %p102, %p103
      %p105 = scmp.ne.s32.totalorder %s97, %s99
      %p106 = scmp.eq.s32.totalorder %s26, 1
      %p107 = por %p105, %p106
      %p108 = scmp.ne.s32.totalorder %s99, %s100
      %p109 = scmp.eq.s32.totalorder %s26, 0
      %p110 = por %p108, %p109
      %p111 = scmp.ne.s32.totalorder %s99, %s100
      %p112 = scmp.eq.s32.totalorder %s27, 1
      %p113 = por %p111, %p112
      %p115 = scmp.ne.s32.totalorder %s100, %s114
      %p116 = scmp.eq.s32.totalorder %s27, 0
      %p117 = por %p115, %p116
      %s119 = sadd.s32 %s118, 1
      %p122 = scmp.eq.s32.totalorder %s21, 1
      %p123 = scmp.ne.s32.totalorder %s118, %s120
      %p124 = scmp.eq.s32.totalorder %s21, 0
      %p125 = por %p123, %p124
      %p126 = scmp.ne.s32.totalorder %s118, %s120
      %p127 = scmp.eq.s32.totalorder %s26, 1
      %p128 = por %p126, %p127
      %p129 = scmp.ne.s32.totalorder %s120, %s121
      %p130 = scmp.eq.s32.totalorder %s26, 0
      %p131 = por %p129, %p130
      %p132 = scmp.ne.s32.totalorder %s120, %s121
      %p133 = scmp.eq.s32.totalorder %s27, 1
      %p134 = por %p132, %p133
      %p136 = scmp.ne.s32.totalorder %s121, %s135
      %p137 = scmp.eq.s32.totalorder %s27, 0
      %p138 = por %p136, %p137
      %s140 = sadd.s32 %s139, 1
      %p143 = scmp.eq.s32.totalorder %s21, 1
      %p144 = scmp.ne.s32.totalorder %s139, %s141
      %p145 = scmp.eq.s32.totalorder %s21, 0
      %p146 = por %p144, %p145
      %p147 = scmp.ne.s32.totalorder %s139, %s141
      %p148 = scmp.eq.s32.totalorder %s26, 1
      %p149 = por %p147, %p148
      %p150 = scmp.ne.s32.totalorder %s141, %s142
      %p151 = scmp.eq.s32.totalorder %s26, 0
      %p152 = por %p150, %p151
      %p153 = scmp.ne.s32.totalorder %s141, %s142
      %p154 = scmp.eq.s32.totalorder %s27, 1
      %p155 = por %p153, %p154
      %p157 = scmp.ne.s32.totalorder %s142, %s156
      %p158 = scmp.eq.s32.totalorder %s27, 0
      %p159 = por %p157, %p158
      %s161 = sadd.s32 %s160, 1
      %p164 = scmp.eq.s32.totalorder %s21, 1
      %p165 = scmp.ne.s32.totalorder %s160, %s162
      %p166 = scmp.eq.s32.totalorder %s21, 0
      %p167 = por %p165, %p166
      %p168 = scmp.ne.s32.totalorder %s160, %s162
      %p169 = scmp.eq.s32.totalorder %s26, 1
      %p170 = por %p168, %p169
      %p171 = scmp.ne.s32.totalorder %s162, %s163
      %p172 = scmp.eq.s32.totalorder %s26, 0
      %p173 = por %p171, %p172
      %p174 = scmp.ne.s32.totalorder %s162, %s163
      %p175 = scmp.eq.s32.totalorder %s27, 1
      %p176 = por %p174, %p175
      %p178 = scmp.ne.s32.totalorder %s163, %s177
      %p179 = scmp.eq.s32.totalorder %s27, 0
      %p180 = por %p178, %p179
      %s182 = sadd.s32 %s181, 1
      %p185 = scmp.eq.s32.totalorder %s21, 1
      %p186 = scmp.ne.s32.totalorder %s181, %s183
      %p187 = scmp.eq.s32.totalorder %s21, 0
      %p188 = por %p186, %p187
      %p189 = scmp.ne.s32.totalorder %s181, %s183
      %p190 = scmp.eq.s32.totalorder %s26, 1
      %p191 = por %p189, %p190
      %p192 = scmp.ne.s32.totalorder %s183, %s184
      %p193 = scmp.eq.s32.totalorder %s26, 0
      %p194 = por %p192, %p193
      %p195 = scmp.ne.s32.totalorder %s183, %s184
      %p196 = scmp.eq.s32.totalorder %s27, 1
      %p197 = por %p195, %p196
      %p199 = scmp.ne.s32.totalorder %s184, %s198
      %p200 = scmp.eq.s32.totalorder %s27, 0
      %p201 = por %p199, %p200
      %s203 = sadd.s32 %s202, 1
      %p206 = scmp.eq.s32.totalorder %s21, 1
      %p207 = scmp.ne.s32.totalorder %s202, %s204
      %p208 = scmp.eq.s32.totalorder %s21, 0
      %p209 = por %p207, %p208
      %p210 = scmp.ne.s32.totalorder %s202, %s204
      %p211 = scmp.eq.s32.totalorder %s26, 1
      %p212 = por %p210, %p211
      %p213 = scmp.ne.s32.totalorder %s204, %s205
      %p214 = scmp.eq.s32.totalorder %s26, 0
      %p215 = por %p213, %p214
      %p216 = scmp.ne.s32.totalorder %s204, %s205
      %p217 = scmp.eq.s32.totalorder %s27, 1
      %p218 = por %p216, %p217
      %p220 = scmp.ne.s32.totalorder %s205, %s219
      %p221 = scmp.eq.s32.totalorder %s27, 0
      %p222 = por %p220, %p221
      %s223 = ssub.s32 %s21, %s28
      %p224 = scmp.eq.s32.totalorder %s223, 0
      %s226 = sadd.s32 %s225, 1
      %s227 = scalar_select %p224, %s225, %s226
      %p230 = pneg %p224
      %p231 = scmp.eq.s32.totalorder %s21, 1
      %p232 = por %p230, %p231
      %p233 = scmp.ne.s32.totalorder %s225, %s228
      %p234 = scmp.eq.s32.totalorder %s21, 0
      %p235 = por %p233, %p234
      %p236 = scmp.ne.s32.totalorder %s225, %s228
      %p237 = scmp.eq.s32.totalorder %s26, 1
      %p238 = por %p236, %p237
      %p239 = scmp.ne.s32.totalorder %s228, %s229
      %p240 = scmp.eq.s32.totalorder %s26, 0
      %p241 = por %p239, %p240
      %p242 = scmp.ne.s32.totalorder %s228, %s229
      %p243 = scmp.eq.s32.totalorder %s27, 1
      %p244 = por %p242, %p243
      %p246 = scmp.ne.s32.totalorder %s229, %s245
      %p247 = scmp.eq.s32.totalorder %s27, 0
      %p248 = por %p246, %p247
      %p249 = scmp.le.s32.totalorder 1, %s21
      %p250 = scmp.lt.s32.totalorder %s21, 3
      %p251 = pnand %p249, %p250
      %p252 = pneg %p251
      // Predicated region
      $region9: #{tpu_custom_call.1} parent=5 // pred_check
        _
      $region10: #{tpu_custom_call.1} parent=5 // pred_check_branch
        %254 = sbr.rel (%p251) target = $region12
      $region11: #{tpu_custom_call.1} parent=5 // pred_region
        %s255 = ssub.s32 %s21, 1
        // Predicated region
        $region13: #{tpu_custom_call.1} parent=11 // pred_check
          %p256 = pneg %p68
        $region14: #{tpu_custom_call.1} parent=11 // pred_check_branch
          %258 = sbr.rel (%p256) target = $region16
        $region15: #{tpu_custom_call.1} parent=11 // pred_region
          _
        $region16: #{tpu_custom_call.1} parent=11 // pred_fallthru
          _
        // Predicated region
        $region17: #{tpu_custom_call.1} parent=11 // pred_check
          %p259 = pneg %p89
        $region18: #{tpu_custom_call.1} parent=11 // pred_check_branch
          %261 = sbr.rel (%p259) target = $region20
        $region19: #{tpu_custom_call.1} parent=11 // pred_region
          _
        $region20: #{tpu_custom_call.1} parent=11 // pred_fallthru
          _
        // Predicated region
        $region21: #{tpu_custom_call.1} parent=11 // pred_check
          %p262 = pneg %p110
        $region22: #{tpu_custom_call.1} parent=11 // pred_check_branch
          %264 = sbr.rel (%p262) target = $region24
        $region23: #{tpu_custom_call.1} parent=11 // pred_region
          _
        $region24: #{tpu_custom_call.1} parent=11 // pred_fallthru
          _
        // Predicated region
        $region25: #{tpu_custom_call.1} parent=11 // pred_check
          %p265 = pneg %p131
        $region26: #{tpu_custom_call.1} parent=11 // pred_check_branch
          %267 = sbr.rel (%p265) target = $region28
        $region27: #{tpu_custom_call.1} parent=11 // pred_region
          _
        $region28: #{tpu_custom_call.1} parent=11 // pred_fallthru
          _
        // Predicated region
        $region29: #{tpu_custom_call.1} parent=11 // pred_check
          %p268 = pneg %p152
        $region30: #{tpu_custom_call.1} parent=11 // pred_check_branch
          %270 = sbr.rel (%p268) target = $region32
        $region31: #{tpu_custom_call.1} parent=11 // pred_region
          _
        $region32: #{tpu_custom_call.1} parent=11 // pred_fallthru
          _
        // Predicated region
        $region33: #{tpu_custom_call.1} parent=11 // pred_check
          %p271 = pneg %p173
        $region34: #{tpu_custom_call.1} parent=11 // pred_check_branch
          %273 = sbr.rel (%p271) target = $region36
        $region35: #{tpu_custom_call.1} parent=11 // pred_region
          _
        $region36: #{tpu_custom_call.1} parent=11 // pred_fallthru
          _
        // Predicated region
        $region37: #{tpu_custom_call.1} parent=11 // pred_check
          %p274 = pneg %p194
        $region38: #{tpu_custom_call.1} parent=11 // pred_check_branch
          %276 = sbr.rel (%p274) target = $region40
        $region39: #{tpu_custom_call.1} parent=11 // pred_region
          _
        $region40: #{tpu_custom_call.1} parent=11 // pred_fallthru
          _
        // Predicated region
        $region41: #{tpu_custom_call.1} parent=11 // pred_check
          %p277 = pneg %p215
        $region42: #{tpu_custom_call.1} parent=11 // pred_check_branch
          %279 = sbr.rel (%p277) target = $region44
        $region43: #{tpu_custom_call.1} parent=11 // pred_region
          _
        $region44: #{tpu_custom_call.1} parent=11 // pred_fallthru
          _
      $region12: #{tpu_custom_call.1} parent=5 // pred_fallthru
        _
      %p280 = scmp.lt.s32.totalorder %s21, 2
      // Predicated region
      $region45: #{tpu_custom_call.1} parent=5 // pred_check
        %p281 = pneg %p280
      $region46: #{tpu_custom_call.1} parent=5 // pred_check_branch
        %283 = sbr.rel (%p281) target = $region48
      $region47: #{tpu_custom_call.1} parent=5 // pred_region
        // Predicated region
        $region49: #{tpu_custom_call.1} parent=47 // pred_check
          %p284 = pneg %p41
        $region50: #{tpu_custom_call.1} parent=47 // pred_check_branch
          %286 = sbr.rel (%p284) target = $region52
        $region51: #{tpu_custom_call.1} parent=47 // pred_region
          %s287 = sand.u32 %s31, 1
          %s288 = scalar_lea.sflag [#allocation4], %s287
          %s289 = sand.u32 %s31, 1
          %s290 = smul.addr %s289, 256
          %s291 = scalar_lea.vmem [#allocation3], %s290
          %s293 = ssub.s32 4096, 4096
          %294 = vsyncadd %s288, %s293
          %s295 = smul.addr %s21, 32
          %s296 = smul.addr %s295, 128
          %s297 = scalar_lea.hbm %s0, %s296
          %s298 = sshll.u32 %s291, 4
          %s299 = int_to_ptr.vmem [resolvable:$true] %s298
          %304 = dma.hbm_to_vmem [thread:$0]  %s297, 4096, %s299, %s288, 128, 128, 8
        $region52: #{tpu_custom_call.1} parent=47 // pred_fallthru
          _
      $region48: #{tpu_custom_call.1} parent=5 // pred_fallthru
        _
      %p305 = scmp.le.s32.totalorder 1, %s21
      %p306 = scmp.lt.s32.totalorder %s21, 3
      %p307 = pnand %p305, %p306
      %p308 = pneg %p307
      // Predicated region
      $region53: #{tpu_custom_call.1} parent=5 // pred_check
        _
      $region54: #{tpu_custom_call.1} parent=5 // pred_check_branch
        %310 = sbr.rel (%p307) target = $region56
      $region55: #{tpu_custom_call.1} parent=5 // pred_region
        %s311 = ssub.s32 %s21, 1
        %s312 = sand.u32 %s34, 1
        %s313 = scalar_lea.sflag [#allocation4], %s312
        %s314 = sand.u32 %s34, 1
        %s315 = smul.addr %s314, 256
        %s316 = scalar_lea.vmem [#allocation3], %s315
        // Predicated region
        $region57: #{tpu_custom_call.1} parent=55 // pred_check
          %p317 = pneg %p47
        $region58: #{tpu_custom_call.1} parent=55 // pred_check_branch
          %319 = sbr.rel (%p317) target = $region60
        $region59: #{tpu_custom_call.1} parent=55 // pred_region
          %320 = dma.done %s313, 4096
        $region60: #{tpu_custom_call.1} parent=55 // pred_fallthru
          _
        %s321 = sand.u32 %s34, 1
        %s322 = scalar_lea.sflag [#allocation4], %s321
        %s323 = sand.u32 %s34, 1
        %s324 = smul.addr %s323, 256
        %s325 = scalar_lea.vmem [#allocation3], %s324
        %p326 = pneg %p47
        %p327 = pneg %p44
        %p328 = pneg %p68
        %p329 = pneg %p65
        %p330 = pneg %p89
        %p331 = pneg %p86
        %p332 = pneg %p110
        %p333 = pneg %p107
        %p334 = pneg %p131
        %p335 = pneg %p128
        %p336 = pneg %p152
        %p337 = pneg %p149
        %p338 = pneg %p173
        %p339 = pneg %p170
        %p340 = pneg %p194
        %p341 = pneg %p191
        %p342 = pneg %p215
        %p343 = pneg %p212
        %p344 = pneg %p241
        %p345 = pneg %p238
        %s346 = sand.u32 %s228, 1
        %s347 = scalar_lea.sflag [#allocation5], %s346
        %s348 = sand.u32 %s228, 1
        %s349 = smul.addr %s348, 256
        %s350 = scalar_lea.vmem [#allocation6], %s349
        %v351 = vld [vmem:[%s316] sm:$0xff]
        %v352 = vld [vmem:[%s316 + $0x8] sm:$0xff]
        %v353 = vld [vmem:[%s316 + $0x10] sm:$0xff]
        %v354 = vld [vmem:[%s316 + $0x18] sm:$0xff]
        %v355 = vld [vmem:[%s316 + $0x20] sm:$0xff]
        %v356 = vld [vmem:[%s316 + $0x28] sm:$0xff]
        %v357 = vld [vmem:[%s316 + $0x30] sm:$0xff]
        %v358 = vld [vmem:[%s316 + $0x38] sm:$0xff]
        %v359 = vld [vmem:[%s316 + $0x40] sm:$0xff]
        %v360 = vld [vmem:[%s316 + $0x48] sm:$0xff]
        %v361 = vld [vmem:[%s316 + $0x50] sm:$0xff]
        %v362 = vld [vmem:[%s316 + $0x58] sm:$0xff]
        %v363 = vld [vmem:[%s316 + $0x60] sm:$0xff]
        %v364 = vld [vmem:[%s316 + $0x68] sm:$0xff]
        %v365 = vld [vmem:[%s316 + $0x70] sm:$0xff]
        %v366 = vld [vmem:[%s316 + $0x78] sm:$0xff]
        %v367 = vld [vmem:[%s316 + $0x80] sm:$0xff]
        %v368 = vld [vmem:[%s316 + $0x88] sm:$0xff]
        %v369 = vld [vmem:[%s316 + $0x90] sm:$0xff]
        %v370 = vld [vmem:[%s316 + $0x98] sm:$0xff]
        %v371 = vld [vmem:[%s316 + $0xa0] sm:$0xff]
        %v372 = vld [vmem:[%s316 + $0xa8] sm:$0xff]
        %v373 = vld [vmem:[%s316 + $0xb0] sm:$0xff]
        %v374 = vld [vmem:[%s316 + $0xb8] sm:$0xff]
        %v375 = vld [vmem:[%s316 + $0xc0] sm:$0xff]
        %v376 = vld [vmem:[%s316 + $0xc8] sm:$0xff]
        %v377 = vld [vmem:[%s316 + $0xd0] sm:$0xff]
        %v378 = vld [vmem:[%s316 + $0xd8] sm:$0xff]
        %v379 = vld [vmem:[%s316 + $0xe0] sm:$0xff]
        %v380 = vld [vmem:[%s316 + $0xe8] sm:$0xff]
        %v381 = vld [vmem:[%s316 + $0xf0] sm:$0xff]
        %v382 = vld [vmem:[%s316 + $0xf8] sm:$0xff]
        %v383 = vld [vmem:[%s1] sm:$0xff]
        %v384 = vld [vmem:[%s1 + $0x8] sm:$0xff]
        %v385 = vld [vmem:[%s2] sm:$0x1]
        %v387 = vlaneseq
        %v388 = vshrl.u32 %v387, 7
        %v389 = vsub.s32 0, %v388
        %v390 = vrot.slane %v385, %v389
        %vm392 = vcmask 130048
        %v394 = vsel %vm392, %v351, 0
        %v397 = vsel %vm392, %v352, 0
        %v400 = vsel %vm392, %v353, 0
        %v403 = vsel %vm392, %v354, 0
        %v406 = vsel %vm392, %v355, 0
        %v409 = vsel %vm392, %v356, 0
        %v412 = vsel %vm392, %v357, 0
        %v415 = vsel %vm392, %v358, 0
        %v418 = vsel %vm392, %v359, 0
        %v421 = vsel %vm392, %v360, 0
        %v424 = vsel %vm392, %v361, 0
        %v427 = vsel %vm392, %v362, 0
        %v430 = vsel %vm392, %v363, 0
        %v433 = vsel %vm392, %v364, 0
        %v436 = vsel %vm392, %v365, 0
        %v439 = vsel %vm392, %v366, 0
        %v442 = vsel %vm392, %v367, 0
        %v445 = vsel %vm392, %v368, 0
        %v448 = vsel %vm392, %v369, 0
        %v451 = vsel %vm392, %v370, 0
        %v454 = vsel %vm392, %v371, 0
        %v457 = vsel %vm392, %v372, 0
        %v460 = vsel %vm392, %v373, 0
        %v463 = vsel %vm392, %v374, 0
        %v466 = vsel %vm392, %v375, 0
        %v469 = vsel %vm392, %v376, 0
        %v472 = vsel %vm392, %v377, 0
        %v475 = vsel %vm392, %v378, 0
        %v478 = vsel %vm392, %v379, 0
        %v481 = vsel %vm392, %v380, 0
        %v484 = vsel %vm392, %v381, 0
        %v487 = vsel %vm392, %v382, 0
        %489 = vmatprep.subr.mxu0 0.0
        %490 = vmatpush1.msra.mxu0 0.0
        %491 = vmatprep.subr.mxu0 0.0
        %492 = vmatpush1.msra.mxu0 0.0
        %493 = vmatprep.subr.mxu0 0.0
        %494 = vmatpush1.msra.mxu0 0.0
        %495 = vmatprep.subr.mxu0 0.0
        %496 = vmatpush1.msra.mxu0 0.0
        %497 = vmatprep.subr.mxu0 0.0
        %498 = vmatpush1.msra.mxu0 0.0
        %499 = vmatprep.subr.mxu0 0.0
        %500 = vmatpush1.msra.mxu0 0.0
        %501 = vmatprep.subr.mxu0 0.0
        %502 = vmatpush1.msra.mxu0 0.0
        %503 = vmatprep.subr.mxu0 0.0
        %504 = vmatpush1.msra.mxu0 0.0
        %505 = vmatprep.subr.mxu0 0.0
        %506 = vmatpush1.msra.mxu0 0.0
        %507 = vmatprep.subr.mxu0 0.0
        %508 = vmatpush1.msra.mxu0 0.0
        %509 = vmatprep.subr.mxu0 0.0
        %510 = vmatpush1.msra.mxu0 0.0
        %511 = vmatprep.subr.mxu0 0.0
        %512 = vmatpush1.msra.mxu0 0.0
        %513 = vmatprep.subr.mxu0 0.0
        %514 = vmatpush1.msra.mxu0 0.0
        %515 = vmatprep.subr.mxu0 0.0
        %516 = vmatpush1.msra.mxu0 0.0
        %517 = vmatprep.subr.mxu0 0.0
        %518 = vmatpush1.msra.mxu0 %v384
        %519 = vmatprep.subr.mxu0 0.0
        %520 = vmatpush1.msra.mxu0 %v383
        %521 = vmatprep.subr.mxu0 0.0
        %522 = vmatpush2.msra.mxu0 0.0
        %523 = vmatprep.subr.mxu0 0.0
        %524 = vmatpush2.msra.mxu0 0.0
        %525 = vmatprep.subr.mxu0 0.0
        %526 = vmatpush2.msra.mxu0 0.0
        %527 = vmatprep.subr.mxu0 0.0
        %528 = vmatpush2.msra.mxu0 0.0
        %529 = vmatprep.subr.mxu0 0.0
        %530 = vmatpush2.msra.mxu0 0.0
        %531 = vmatprep.subr.mxu0 0.0
        %532 = vmatpush2.msra.mxu0 0.0
        %533 = vmatprep.subr.mxu0 0.0
        %534 = vmatpush2.msra.mxu0 0.0
        %535 = vmatprep.subr.mxu0 0.0
        %536 = vmatpush2.msra.mxu0 0.0
        %537 = vmatprep.subr.mxu0 0.0
        %538 = vmatpush2.msra.mxu0 0.0
        %539 = vmatprep.subr.mxu0 0.0
        %540 = vmatpush2.msra.mxu0 0.0
        %541 = vmatprep.subr.mxu0 0.0
        %542 = vmatpush2.msra.mxu0 0.0
        %543 = vmatprep.subr.mxu0 0.0
        %544 = vmatpush2.msra.mxu0 0.0
        %545 = vmatprep.subr.mxu0 0.0
        %546 = vmatpush2.msra.mxu0 0.0
        %547 = vmatprep.subr.mxu0 0.0
        %548 = vmatpush2.msra.mxu0 0.0
        %549 = vmatprep.subr.mxu0 0.0
        %550 = vmatpush2.msra.mxu0 0.0
        %551 = vmatprep.subr.mxu0 0.0
        %552 = vmatpush2.msra.mxu0 0.0
        %553 = vmatprep.mubr.f32.mxu0 0.0
        %554 = vmatmul.mubr.f32.gmra.mxu0 %v394
        %v555 = vpop.f32.mrf.mxu0
        %v556 = vadd.f32 %v390, %v555
        %v557 = vpop.f32.mrf.mxu0
        %558 = vmatprep.mubr.f32.mxu0 0.0
        %559 = vmatmul.mubr.f32.gmra.mxu0 %v397
        %v560 = vpop.f32.mrf.mxu0
        %v561 = vadd.f32 %v390, %v560
        %v562 = vpop.f32.mrf.mxu0
        %563 = vmatprep.mubr.f32.mxu0 0.0
        %564 = vmatmul.mubr.f32.gmra.mxu0 %v400
        %v565 = vpop.f32.mrf.mxu0
        %v566 = vadd.f32 %v390, %v565
        %v567 = vpop.f32.mrf.mxu0
        %568 = vmatprep.mubr.f32.mxu0 0.0
        %569 = vmatmul.mubr.f32.gmra.mxu0 %v403
        %v570 = vpop.f32.mrf.mxu0
        %v571 = vadd.f32 %v390, %v570
        %v572 = vpop.f32.mrf.mxu0
        %573 = vmatprep.mubr.f32.mxu0 0.0
        %574 = vmatmul.mubr.f32.gmra.mxu0 %v406
        %v575 = vpop.f32.mrf.mxu0
        %v576 = vadd.f32 %v390, %v575
        %v577 = vpop.f32.mrf.mxu0
        %578 = vmatprep.mubr.f32.mxu0 0.0
        %579 = vmatmul.mubr.f32.gmra.mxu0 %v409
        %v580 = vpop.f32.mrf.mxu0
        %v581 = vadd.f32 %v390, %v580
        %v582 = vpop.f32.mrf.mxu0
        %583 = vmatprep.mubr.f32.mxu0 0.0
        %584 = vmatmul.mubr.f32.gmra.mxu0 %v412
        %v585 = vpop.f32.mrf.mxu0
        %v586 = vadd.f32 %v390, %v585
        %v587 = vpop.f32.mrf.mxu0
        %588 = vmatprep.mubr.f32.mxu0 0.0
        %589 = vmatmul.mubr.f32.gmra.mxu0 %v415
        %v590 = vpop.f32.mrf.mxu0
        %v591 = vadd.f32 %v390, %v590
        %v592 = vpop.f32.mrf.mxu0
        %593 = vmatprep.mubr.f32.mxu0 0.0
        %594 = vmatmul.mubr.f32.gmra.mxu0 %v418
        %v595 = vpop.f32.mrf.mxu0
        %v596 = vadd.f32 %v390, %v595
        %v597 = vpop.f32.mrf.mxu0
        %598 = vmatprep.mubr.f32.mxu0 0.0
        %599 = vmatmul.mubr.f32.gmra.mxu0 %v421
        %v600 = vpop.f32.mrf.mxu0
        %v601 = vadd.f32 %v390, %v600
        %v602 = vpop.f32.mrf.mxu0
        %603 = vmatprep.mubr.f32.mxu0 0.0
        %604 = vmatmul.mubr.f32.gmra.mxu0 %v424
        %v605 = vpop.f32.mrf.mxu0
        %v606 = vadd.f32 %v390, %v605
        %v607 = vpop.f32.mrf.mxu0
        %608 = vmatprep.mubr.f32.mxu0 0.0
        %609 = vmatmul.mubr.f32.gmra.mxu0 %v427
        %v610 = vpop.f32.mrf.mxu0
        %v611 = vadd.f32 %v390, %v610
        %v612 = vpop.f32.mrf.mxu0
        %613 = vmatprep.mubr.f32.mxu0 0.0
        %614 = vmatmul.mubr.f32.gmra.mxu0 %v430
        %v615 = vpop.f32.mrf.mxu0
        %v616 = vadd.f32 %v390, %v615
        %v617 = vpop.f32.mrf.mxu0
        %618 = vmatprep.mubr.f32.mxu0 0.0
        %619 = vmatmul.mubr.f32.gmra.mxu0 %v433
        %v620 = vpop.f32.mrf.mxu0
        %v621 = vadd.f32 %v390, %v620
        %v622 = vpop.f32.mrf.mxu0
        %623 = vmatprep.mubr.f32.mxu0 0.0
        %624 = vmatmul.mubr.f32.gmra.mxu0 %v436
        %v625 = vpop.f32.mrf.mxu0
        %v626 = vadd.f32 %v390, %v625
        %v627 = vpop.f32.mrf.mxu0
        %628 = vmatprep.mubr.f32.mxu0 0.0
        %629 = vmatmul.mubr.f32.gmra.mxu0 %v439
        %v630 = vpop.f32.mrf.mxu0
        %v631 = vadd.f32 %v390, %v630
        %v632 = vpop.f32.mrf.mxu0
        %633 = vmatprep.mubr.f32.mxu0 0.0
        %634 = vmatmul.mubr.f32.gmra.mxu0 %v442
        %v635 = vpop.f32.mrf.mxu0
        %v636 = vadd.f32 %v390, %v635
        %v637 = vpop.f32.mrf.mxu0
        %638 = vmatprep.mubr.f32.mxu0 0.0
        %639 = vmatmul.mubr.f32.gmra.mxu0 %v445
        %v640 = vpop.f32.mrf.mxu0
        %v641 = vadd.f32 %v390, %v640
        %v642 = vpop.f32.mrf.mxu0
        %643 = vmatprep.mubr.f32.mxu0 0.0
        %644 = vmatmul.mubr.f32.gmra.mxu0 %v448
        %v645 = vpop.f32.mrf.mxu0
        %v646 = vadd.f32 %v390, %v645
        %v647 = vpop.f32.mrf.mxu0
        %648 = vmatprep.mubr.f32.mxu0 0.0
        %649 = vmatmul.mubr.f32.gmra.mxu0 %v451
        %v650 = vpop.f32.mrf.mxu0
        %v651 = vadd.f32 %v390, %v650
        %v652 = vpop.f32.mrf.mxu0
        %653 = vmatprep.mubr.f32.mxu0 0.0
        %654 = vmatmul.mubr.f32.gmra.mxu0 %v454
        %v655 = vpop.f32.mrf.mxu0
        %v656 = vadd.f32 %v390, %v655
        %v657 = vpop.f32.mrf.mxu0
        %658 = vmatprep.mubr.f32.mxu0 0.0
        %659 = vmatmul.mubr.f32.gmra.mxu0 %v457
        %v660 = vpop.f32.mrf.mxu0
        %v661 = vadd.f32 %v390, %v660
        %v662 = vpop.f32.mrf.mxu0
        %663 = vmatprep.mubr.f32.mxu0 0.0
        %664 = vmatmul.mubr.f32.gmra.mxu0 %v460
        %v665 = vpop.f32.mrf.mxu0
        %v666 = vadd.f32 %v390, %v665
        %v667 = vpop.f32.mrf.mxu0
        %668 = vmatprep.mubr.f32.mxu0 0.0
        %669 = vmatmul.mubr.f32.gmra.mxu0 %v463
        %v670 = vpop.f32.mrf.mxu0
        %v671 = vadd.f32 %v390, %v670
        %v672 = vpop.f32.mrf.mxu0
        %673 = vmatprep.mubr.f32.mxu0 0.0
        %674 = vmatmul.mubr.f32.gmra.mxu0 %v466
        %v675 = vpop.f32.mrf.mxu0
        %v676 = vadd.f32 %v390, %v675
        %v677 = vpop.f32.mrf.mxu0
        %678 = vmatprep.mubr.f32.mxu0 0.0
        %679 = vmatmul.mubr.f32.gmra.mxu0 %v469
        %v680 = vpop.f32.mrf.mxu0
        %v681 = vadd.f32 %v390, %v680
        %v682 = vpop.f32.mrf.mxu0
        %683 = vmatprep.mubr.f32.mxu0 0.0
        %684 = vmatmul.mubr.f32.gmra.mxu0 %v472
        %v685 = vpop.f32.mrf.mxu0
        %v686 = vadd.f32 %v390, %v685
        %v687 = vpop.f32.mrf.mxu0
        %688 = vmatprep.mubr.f32.mxu0 0.0
        %689 = vmatmul.mubr.f32.gmra.mxu0 %v475
        %v690 = vpop.f32.mrf.mxu0
        %v691 = vadd.f32 %v390, %v690
        %v692 = vpop.f32.mrf.mxu0
        %693 = vmatprep.mubr.f32.mxu0 0.0
        %694 = vmatmul.mubr.f32.gmra.mxu0 %v478
        %v695 = vpop.f32.mrf.mxu0
        %v696 = vadd.f32 %v390, %v695
        %v697 = vpop.f32.mrf.mxu0
        %698 = vmatprep.mubr.f32.mxu0 0.0
        %699 = vmatmul.mubr.f32.gmra.mxu0 %v481
        %v700 = vpop.f32.mrf.mxu0
        %v701 = vadd.f32 %v390, %v700
        %v702 = vpop.f32.mrf.mxu0
        %703 = vmatprep.mubr.f32.mxu0 0.0
        %704 = vmatmul.mubr.f32.gmra.mxu0 %v484
        %v705 = vpop.f32.mrf.mxu0
        %v706 = vadd.f32 %v390, %v705
        %v707 = vpop.f32.mrf.mxu0
        %708 = vmatprep.mubr.f32.mxu0 0.0
        %709 = vmatmul.mubr.f32.gmra.mxu0 %v487
        %v710 = vpop.f32.mrf.mxu0
        %v711 = vadd.f32 %v390, %v710
        %v712 = vpop.f32.mrf.mxu0
        %713 = vdwg.mxu0
        %v714 = vmax.f32 %v556, 0.0
        %v715 = vmax.f32 %v561, 0.0
        %v716 = vmax.f32 %v566, 0.0
        %v717 = vmax.f32 %v571, 0.0
        %v718 = vmax.f32 %v576, 0.0
        %v719 = vmax.f32 %v581, 0.0
        %v720 = vmax.f32 %v586, 0.0
        %v721 = vmax.f32 %v591, 0.0
        %v722 = vmax.f32 %v596, 0.0
        %v723 = vmax.f32 %v601, 0.0
        %v724 = vmax.f32 %v606, 0.0
        %v725 = vmax.f32 %v611, 0.0
        %v726 = vmax.f32 %v616, 0.0
        %v727 = vmax.f32 %v621, 0.0
        %v728 = vmax.f32 %v626, 0.0
        %v729 = vmax.f32 %v631, 0.0
        %v730 = vmax.f32 %v636, 0.0
        %v731 = vmax.f32 %v641, 0.0
        %v732 = vmax.f32 %v646, 0.0
        %v733 = vmax.f32 %v651, 0.0
        %v734 = vmax.f32 %v656, 0.0
        %v735 = vmax.f32 %v661, 0.0
        %v736 = vmax.f32 %v666, 0.0
        %v737 = vmax.f32 %v671, 0.0
        %v738 = vmax.f32 %v676, 0.0
        %v739 = vmax.f32 %v681, 0.0
        %v740 = vmax.f32 %v686, 0.0
        %v741 = vmax.f32 %v691, 0.0
        %v742 = vmax.f32 %v696, 0.0
        %v743 = vmax.f32 %v701, 0.0
        %v744 = vmax.f32 %v706, 0.0
        %v745 = vmax.f32 %v711, 0.0
        %vm746 = vcmask 261120
        %747 = vst.msk [vmem:[#allocation2] sm:$0xff] %vm746, 0.0
        %748 = vst.msk [vmem:[#allocation2 + $0x8] sm:$0xff] %vm746, 0.0
        %vm749 = vcmask 254976
        %750 = vst.msk [vmem:[#allocation2 + $0x10] sm:$0x3] %vm749, 0.0
        %751 = vst.msk [vmem:[#allocation2 + $0x18] sm:$0xff] %vm746, 0.0
        %752 = vst.msk [vmem:[#allocation2 + $0x20] sm:$0xff] %vm746, 0.0
        %753 = vst.msk [vmem:[#allocation2 + $0x28] sm:$0x3] %vm749, 0.0
        %754 = vst.msk [vmem:[#allocation2 + $0x30] sm:$0xff] %vm746, 0.0
        %755 = vst.msk [vmem:[#allocation2 + $0x38] sm:$0xff] %vm746, 0.0
        %756 = vst.msk [vmem:[#allocation2 + $0x40] sm:$0x3] %vm749, 0.0
        %757 = vst.msk [vmem:[#allocation2 + $0x48] sm:$0xff] %vm746, 0.0
        %758 = vst.msk [vmem:[#allocation2 + $0x50] sm:$0xff] %vm746, 0.0
        %759 = vst.msk [vmem:[#allocation2 + $0x58] sm:$0x3] %vm749, 0.0
        %760 = vst.msk [vmem:[#allocation2 + $0x60] sm:$0xff] %vm746, 0.0
        %761 = vst.msk [vmem:[#allocation2 + $0x68] sm:$0xff] %vm746, 0.0
        %762 = vst.msk [vmem:[#allocation2 + $0x70] sm:$0x3] %vm749, 0.0
        %763 = vst.msk [vmem:[#allocation2 + $0x78] sm:$0xff] %vm746, 0.0
        %764 = vst.msk [vmem:[#allocation2 + $0x80] sm:$0xff] %vm746, 0.0
        %765 = vst.msk [vmem:[#allocation2 + $0x88] sm:$0x3] %vm749, 0.0
        %766 = vst.msk [vmem:[#allocation2 + $0x90] sm:$0xff] %vm746, 0.0
        %767 = vst.msk [vmem:[#allocation2 + $0x98] sm:$0xff] %vm746, 0.0
        %768 = vst.msk [vmem:[#allocation2 + $0xa0] sm:$0x3] %vm749, 0.0
        %769 = vst.msk [vmem:[#allocation2 + $0xa8] sm:$0xff] %vm746, 0.0
        %770 = vst.msk [vmem:[#allocation2 + $0xb0] sm:$0xff] %vm746, 0.0
        %771 = vst.msk [vmem:[#allocation2 + $0xb8] sm:$0x3] %vm749, 0.0
        %772 = vst.msk [vmem:[#allocation2 + $0xc0] sm:$0xff] %vm746, 0.0
        %773 = vst.msk [vmem:[#allocation2 + $0xc8] sm:$0xff] %vm746, 0.0
        %774 = vst.msk [vmem:[#allocation2 + $0xd0] sm:$0x3] %vm749, 0.0
        %775 = vst.msk [vmem:[#allocation2 + $0xd8] sm:$0xff] %vm746, 0.0
        %776 = vst.msk [vmem:[#allocation2 + $0xe0] sm:$0xff] %vm746, 0.0
        %777 = vst.msk [vmem:[#allocation2 + $0xe8] sm:$0x3] %vm749, 0.0
        %778 = vst.msk [vmem:[#allocation2 + $0xf0] sm:$0xff] %vm746, 0.0
        %779 = vst.msk [vmem:[#allocation2 + $0xf8] sm:$0xff] %vm746, 0.0
        %780 = vst.msk [vmem:[#allocation2 + $0x100] sm:$0x3] %vm749, 0.0
        %781 = vst.msk [vmem:[#allocation2 + $0x108] sm:$0xff] %vm746, 0.0
        %782 = vst.msk [vmem:[#allocation2 + $0x110] sm:$0xff] %vm746, 0.0
        %783 = vst.msk [vmem:[#allocation2 + $0x118] sm:$0x3] %vm749, 0.0
        %784 = vst.msk [vmem:[#allocation2 + $0x120] sm:$0xff] %vm746, 0.0
        %785 = vst.msk [vmem:[#allocation2 + $0x128] sm:$0xff] %vm746, 0.0
        %786 = vst.msk [vmem:[#allocation2 + $0x130] sm:$0x3] %vm749, 0.0
        %787 = vst.msk [vmem:[#allocation2 + $0x138] sm:$0xff] %vm746, 0.0
        %788 = vst.msk [vmem:[#allocation2 + $0x140] sm:$0xff] %vm746, 0.0
        %789 = vst.msk [vmem:[#allocation2 + $0x148] sm:$0x3] %vm749, 0.0
        %790 = vst.msk [vmem:[#allocation2 + $0x150] sm:$0xff] %vm746, 0.0
        %791 = vst.msk [vmem:[#allocation2 + $0x158] sm:$0xff] %vm746, 0.0
        %792 = vst.msk [vmem:[#allocation2 + $0x160] sm:$0x3] %vm749, 0.0
        %793 = vst.msk [vmem:[#allocation2 + $0x168] sm:$0xff] %vm746, 0.0
        %794 = vst.msk [vmem:[#allocation2 + $0x170] sm:$0xff] %vm746, 0.0
        %795 = vst.msk [vmem:[#allocation2 + $0x178] sm:$0x3] %vm749, 0.0
        %796 = vst.msk [vmem:[#allocation2 + $0x180] sm:$0xff] %vm746, 0.0
        %797 = vst.msk [vmem:[#allocation2 + $0x188] sm:$0xff] %vm746, 0.0
        %798 = vst.msk [vmem:[#allocation2 + $0x190] sm:$0x3] %vm749, 0.0
        %799 = vst.msk [vmem:[#allocation2 + $0x198] sm:$0xff] %vm746, 0.0
        %800 = vst.msk [vmem:[#allocation2 + $0x1a0] sm:$0xff] %vm746, 0.0
        %801 = vst.msk [vmem:[#allocation2 + $0x1a8] sm:$0x3] %vm749, 0.0
        %s802 = scalar_lea.vmem [#allocation2], 24
        %803 = vst.msk [vmem:[%s802 + $0x1] sm:$0xff] %vm746, %v714
        %804 = vst.msk [vmem:[%s802 + $0x9] sm:$0xff] %vm746, %v715
        %805 = vst.msk [vmem:[%s802 + $0x19] sm:$0xff] %vm746, %v716
        %806 = vst.msk [vmem:[%s802 + $0x21] sm:$0xff] %vm746, %v717
        %807 = vst.msk [vmem:[%s802 + $0x31] sm:$0xff] %vm746, %v718
        %808 = vst.msk [vmem:[%s802 + $0x39] sm:$0xff] %vm746, %v719
        %809 = vst.msk [vmem:[%s802 + $0x49] sm:$0xff] %vm746, %v720
        %810 = vst.msk [vmem:[%s802 + $0x51] sm:$0xff] %vm746, %v721
        %811 = vst.msk [vmem:[%s802 + $0x61] sm:$0xff] %vm746, %v722
        %812 = vst.msk [vmem:[%s802 + $0x69] sm:$0xff] %vm746, %v723
        %813 = vst.msk [vmem:[%s802 + $0x79] sm:$0xff] %vm746, %v724
        %814 = vst.msk [vmem:[%s802 + $0x81] sm:$0xff] %vm746, %v725
        %815 = vst.msk [vmem:[%s802 + $0x91] sm:$0xff] %vm746, %v726
        %816 = vst.msk [vmem:[%s802 + $0x99] sm:$0xff] %vm746, %v727
        %817 = vst.msk [vmem:[%s802 + $0xa9] sm:$0xff] %vm746, %v728
        %818 = vst.msk [vmem:[%s802 + $0xb1] sm:$0xff] %vm746, %v729
        %819 = vst.msk [vmem:[%s802 + $0xc1] sm:$0xff] %vm746, %v730
        %820 = vst.msk [vmem:[%s802 + $0xc9] sm:$0xff] %vm746, %v731
        %821 = vst.msk [vmem:[%s802 + $0xd9] sm:$0xff] %vm746, %v732
        %822 = vst.msk [vmem:[%s802 + $0xe1] sm:$0xff] %vm746, %v733
        %823 = vst.msk [vmem:[%s802 + $0xf1] sm:$0xff] %vm746, %v734
        %824 = vst.msk [vmem:[%s802 + $0xf9] sm:$0xff] %vm746, %v735
        %825 = vst.msk [vmem:[%s802 + $0x109] sm:$0xff] %vm746, %v736
        %826 = vst.msk [vmem:[%s802 + $0x111] sm:$0xff] %vm746, %v737
        %827 = vst.msk [vmem:[%s802 + $0x121] sm:$0xff] %vm746, %v738
        %828 = vst.msk [vmem:[%s802 + $0x129] sm:$0xff] %vm746, %v739
        %829 = vst.msk [vmem:[%s802 + $0x139] sm:$0xff] %vm746, %v740
        %830 = vst.msk [vmem:[%s802 + $0x141] sm:$0xff] %vm746, %v741
        %831 = vst.msk [vmem:[%s802 + $0x151] sm:$0xff] %vm746, %v742
        %832 = vst.msk [vmem:[%s802 + $0x159] sm:$0xff] %vm746, %v743
        %833 = vst.msk [vmem:[%s802 + $0x169] sm:$0xff] %vm746, %v744
        %834 = vst.msk [vmem:[%s802 + $0x171] sm:$0xff] %vm746, %v745
        %v835 = vld [vmem:[%s3] sm:$0x7]
        %v836 = vld [vmem:[%s3 + $0x4] sm:$0x7]
        %v837 = vld [vmem:[%s3 + $0x8] sm:$0x7]
        %v838 = vld [vmem:[#allocation2] sm:$0xff]
        %v839 = vld [vmem:[#allocation2 + $0x8] sm:$0xff]
        %v840 = vld [vmem:[#allocation2 + $0x18] sm:$0xff]
        %v841 = vld [vmem:[#allocation2 + $0x20] sm:$0xff]
        %v842 = vld [vmem:[#allocation2 + $0x30] sm:$0xff]
        %v843 = vld [vmem:[#allocation2 + $0x38] sm:$0xff]
        %v844 = vld [vmem:[#allocation2 + $0x48] sm:$0xff]
        %v845 = vld [vmem:[#allocation2 + $0x50] sm:$0xff]
        %v846 = vld [vmem:[#allocation2 + $0x60] sm:$0xff]
        %v847 = vld [vmem:[#allocation2 + $0x68] sm:$0xff]
        %v848 = vld [vmem:[#allocation2 + $0x78] sm:$0xff]
        %v849 = vld [vmem:[#allocation2 + $0x80] sm:$0xff]
        %v850 = vld [vmem:[#allocation2 + $0x90] sm:$0xff]
        %v851 = vld [vmem:[#allocation2 + $0x98] sm:$0xff]
        %v852 = vld [vmem:[#allocation2 + $0xa8] sm:$0xff]
        %v853 = vld [vmem:[#allocation2 + $0xb0] sm:$0xff]
        %v854 = vld [vmem:[#allocation2 + $0xc0] sm:$0xff]
        %v855 = vld [vmem:[#allocation2 + $0xc8] sm:$0xff]
        %v856 = vld [vmem:[#allocation2 + $0xd8] sm:$0xff]
        %v857 = vld [vmem:[#allocation2 + $0xe0] sm:$0xff]
        %v858 = vld [vmem:[#allocation2 + $0xf0] sm:$0xff]
        %v859 = vld [vmem:[#allocation2 + $0xf8] sm:$0xff]
        %v860 = vld [vmem:[#allocation2 + $0x108] sm:$0xff]
        %v861 = vld [vmem:[#allocation2 + $0x110] sm:$0xff]
        %v862 = vld [vmem:[#allocation2 + $0x120] sm:$0xff]
        %v863 = vld [vmem:[#allocation2 + $0x128] sm:$0xff]
        %v864 = vld [vmem:[#allocation2 + $0x138] sm:$0xff]
        %v865 = vld [vmem:[#allocation2 + $0x140] sm:$0xff]
        %v866 = vld [vmem:[#allocation2 + $0x150] sm:$0xff]
        %v867 = vld [vmem:[#allocation2 + $0x158] sm:$0xff]
        %v868 = vld [vmem:[#allocation2 + $0x168] sm:$0xff]
        %v869 = vld [vmem:[#allocation2 + $0x170] sm:$0xff]
        %v870 = vlaneseq
        %v871 = vshrl.u32 %v870, 7
        %v872 = vsub.s32 0, %v871
        %v873 = vrot.slane %v835, %v872
        %v874 = vmul.f32 %v838, %v873
        %v875 = vmul.f32 %v839, %v873
        %v876 = vmul.f32 %v840, %v873
        %v877 = vmul.f32 %v841, %v873
        %v878 = vmul.f32 %v842, %v873
        %v879 = vmul.f32 %v843, %v873
        %v880 = vmul.f32 %v844, %v873
        %v881 = vmul.f32 %v845, %v873
        %v882 = vmul.f32 %v846, %v873
        %v883 = vmul.f32 %v847, %v873
        %v884 = vmul.f32 %v848, %v873
        %v885 = vmul.f32 %v849, %v873
        %v886 = vmul.f32 %v850, %v873
        %v887 = vmul.f32 %v851, %v873
        %v888 = vmul.f32 %v852, %v873
        %v889 = vmul.f32 %v853, %v873
        %v890 = vmul.f32 %v854, %v873
        %v891 = vmul.f32 %v855, %v873
        %v892 = vmul.f32 %v856, %v873
        %v893 = vmul.f32 %v857, %v873
        %v894 = vmul.f32 %v858, %v873
        %v895 = vmul.f32 %v859, %v873
        %v896 = vmul.f32 %v860, %v873
        %v897 = vmul.f32 %v861, %v873
        %v898 = vmul.f32 %v862, %v873
        %v899 = vmul.f32 %v863, %v873
        %v900 = vmul.f32 %v864, %v873
        %v901 = vmul.f32 %v865, %v873
        %v902 = vmul.f32 %v866, %v873
        %v903 = vmul.f32 %v867, %v873
        %v904 = vmul.f32 %v868, %v873
        %v905 = vmul.f32 %v869, %v873
        %v906 = vadd.f32 %v874, 0.0
        %v907 = vadd.f32 %v875, 0.0
        %v908 = vadd.f32 %v876, 0.0
        %v909 = vadd.f32 %v877, 0.0
        %v910 = vadd.f32 %v878, 0.0
        %v911 = vadd.f32 %v879, 0.0
        %v912 = vadd.f32 %v880, 0.0
        %v913 = vadd.f32 %v881, 0.0
        %v914 = vadd.f32 %v882, 0.0
        %v915 = vadd.f32 %v883, 0.0
        %v916 = vadd.f32 %v884, 0.0
        %v917 = vadd.f32 %v885, 0.0
        %v918 = vadd.f32 %v886, 0.0
        %v919 = vadd.f32 %v887, 0.0
        %v920 = vadd.f32 %v888, 0.0
        %v921 = vadd.f32 %v889, 0.0
        %v922 = vadd.f32 %v890, 0.0
        %v923 = vadd.f32 %v891, 0.0
        %v924 = vadd.f32 %v892, 0.0
        %v925 = vadd.f32 %v893, 0.0
        %v926 = vadd.f32 %v894, 0.0
        %v927 = vadd.f32 %v895, 0.0
        %v928 = vadd.f32 %v896, 0.0
        %v929 = vadd.f32 %v897, 0.0
        %v930 = vadd.f32 %v898, 0.0
        %v931 = vadd.f32 %v899, 0.0
        %v932 = vadd.f32 %v900, 0.0
        %v933 = vadd.f32 %v901, 0.0
        %v934 = vadd.f32 %v902, 0.0
        %v935 = vadd.f32 %v903, 0.0
        %v936 = vadd.f32 %v904, 0.0
        %v937 = vadd.f32 %v905, 0.0
        %v938 = vld [vmem:[#allocation2 + $0x1] sm:$0xff]
        %v939 = vld [vmem:[#allocation2 + $0x9] sm:$0xff]
        %v940 = vld [vmem:[#allocation2 + $0x19] sm:$0xff]
        %v941 = vld [vmem:[#allocation2 + $0x21] sm:$0xff]
        %v942 = vld [vmem:[#allocation2 + $0x31] sm:$0xff]
        %v943 = vld [vmem:[#allocation2 + $0x39] sm:$0xff]
        %v944 = vld [vmem:[#allocation2 + $0x49] sm:$0xff]
        %v945 = vld [vmem:[#allocation2 + $0x51] sm:$0xff]
        %v946 = vld [vmem:[#allocation2 + $0x61] sm:$0xff]
        %v947 = vld [vmem:[#allocation2 + $0x69] sm:$0xff]
        %v948 = vld [vmem:[#allocation2 + $0x79] sm:$0xff]
        %v949 = vld [vmem:[#allocation2 + $0x81] sm:$0xff]
        %v950 = vld [vmem:[#allocation2 + $0x91] sm:$0xff]
        %v951 = vld [vmem:[#allocation2 + $0x99] sm:$0xff]
        %v952 = vld [vmem:[#allocation2 + $0xa9] sm:$0xff]
        %v953 = vld [vmem:[#allocation2 + $0xb1] sm:$0xff]
        %v954 = vld [vmem:[#allocation2 + $0xc1] sm:$0xff]
        %v955 = vld [vmem:[#allocation2 + $0xc9] sm:$0xff]
        %v956 = vld [vmem:[#allocation2 + $0xd9] sm:$0xff]
        %v957 = vld [vmem:[#allocation2 + $0xe1] sm:$0xff]
        %v958 = vld [vmem:[#allocation2 + $0xf1] sm:$0xff]
        %v959 = vld [vmem:[#allocation2 + $0xf9] sm:$0xff]
        %v960 = vld [vmem:[#allocation2 + $0x109] sm:$0xff]
        %v961 = vld [vmem:[#allocation2 + $0x111] sm:$0xff]
        %v962 = vld [vmem:[#allocation2 + $0x121] sm:$0xff]
        %v963 = vld [vmem:[#allocation2 + $0x129] sm:$0xff]
        %v964 = vld [vmem:[#allocation2 + $0x139] sm:$0xff]
        %v965 = vld [vmem:[#allocation2 + $0x141] sm:$0xff]
        %v966 = vld [vmem:[#allocation2 + $0x151] sm:$0xff]
        %v967 = vld [vmem:[#allocation2 + $0x159] sm:$0xff]
        %v968 = vld [vmem:[#allocation2 + $0x169] sm:$0xff]
        %v969 = vld [vmem:[#allocation2 + $0x171] sm:$0xff]
        %v970 = vlaneseq
        %v971 = vshrl.u32 %v970, 7
        %v972 = vsub.s32 1, %v971
        %v973 = vrot.slane %v835, %v972
        %v974 = vmul.f32 %v938, %v973
        %v975 = vmul.f32 %v939, %v973
        %v976 = vmul.f32 %v940, %v973
        %v977 = vmul.f32 %v941, %v973
        %v978 = vmul.f32 %v942, %v973
        %v979 = vmul.f32 %v943, %v973
        %v980 = vmul.f32 %v944, %v973
        %v981 = vmul.f32 %v945, %v973
        %v982 = vmul.f32 %v946, %v973
        %v983 = vmul.f32 %v947, %v973
        %v984 = vmul.f32 %v948, %v973
        %v985 = vmul.f32 %v949, %v973
        %v986 = vmul.f32 %v950, %v973
        %v987 = vmul.f32 %v951, %v973
        %v988 = vmul.f32 %v952, %v973
        %v989 = vmul.f32 %v953, %v973
        %v990 = vmul.f32 %v954, %v973
        %v991 = vmul.f32 %v955, %v973
        %v992 = vmul.f32 %v956, %v973
        %v993 = vmul.f32 %v957, %v973
        %v994 = vmul.f32 %v958, %v973
        %v995 = vmul.f32 %v959, %v973
        %v996 = vmul.f32 %v960, %v973
        %v997 = vmul.f32 %v961, %v973
        %v998 = vmul.f32 %v962, %v973
        %v999 = vmul.f32 %v963, %v973
        %v1000 = vmul.f32 %v964, %v973
        %v1001 = vmul.f32 %v965, %v973
        %v1002 = vmul.f32 %v966, %v973
        %v1003 = vmul.f32 %v967, %v973
        %v1004 = vmul.f32 %v968, %v973
        %v1005 = vmul.f32 %v969, %v973
        %v1006 = vadd.f32 %v906, %v974
        %v1007 = vadd.f32 %v907, %v975
        %v1008 = vadd.f32 %v908, %v976
        %v1009 = vadd.f32 %v909, %v977
        %v1010 = vadd.f32 %v910, %v978
        %v1011 = vadd.f32 %v911, %v979
        %v1012 = vadd.f32 %v912, %v980
        %v1013 = vadd.f32 %v913, %v981
        %v1014 = vadd.f32 %v914, %v982
        %v1015 = vadd.f32 %v915, %v983
        %v1016 = vadd.f32 %v916, %v984
        %v1017 = vadd.f32 %v917, %v985
        %v1018 = vadd.f32 %v918, %v986
        %v1019 = vadd.f32 %v919, %v987
        %v1020 = vadd.f32 %v920, %v988
        %v1021 = vadd.f32 %v921, %v989
        %v1022 = vadd.f32 %v922, %v990
        %v1023 = vadd.f32 %v923, %v991
        %v1024 = vadd.f32 %v924, %v992
        %v1025 = vadd.f32 %v925, %v993
        %v1026 = vadd.f32 %v926, %v994
        %v1027 = vadd.f32 %v927, %v995
        %v1028 = vadd.f32 %v928, %v996
        %v1029 = vadd.f32 %v929, %v997
        %v1030 = vadd.f32 %v930, %v998
        %v1031 = vadd.f32 %v931, %v999
        %v1032 = vadd.f32 %v932, %v1000
        %v1033 = vadd.f32 %v933, %v1001
        %v1034 = vadd.f32 %v934, %v1002
        %v1035 = vadd.f32 %v935, %v1003
        %v1036 = vadd.f32 %v936, %v1004
        %v1037 = vadd.f32 %v937, %v1005
        %v1038 = vld [vmem:[#allocation2 + $0x2] sm:$0xff]
        %v1039 = vld [vmem:[#allocation2 + $0xa] sm:$0xff]
        %v1040 = vld [vmem:[#allocation2 + $0x1a] sm:$0xff]
        %v1041 = vld [vmem:[#allocation2 + $0x22] sm:$0xff]
        %v1042 = vld [vmem:[#allocation2 + $0x32] sm:$0xff]
        %v1043 = vld [vmem:[#allocation2 + $0x3a] sm:$0xff]
        %v1044 = vld [vmem:[#allocation2 + $0x4a] sm:$0xff]
        %v1045 = vld [vmem:[#allocation2 + $0x52] sm:$0xff]
        %v1046 = vld [vmem:[#allocation2 + $0x62] sm:$0xff]
        %v1047 = vld [vmem:[#allocation2 + $0x6a] sm:$0xff]
        %v1048 = vld [vmem:[#allocation2 + $0x7a] sm:$0xff]
        %v1049 = vld [vmem:[#allocation2 + $0x82] sm:$0xff]
        %v1050 = vld [vmem:[#allocation2 + $0x92] sm:$0xff]
        %v1051 = vld [vmem:[#allocation2 + $0x9a] sm:$0xff]
        %v1052 = vld [vmem:[#allocation2 + $0xaa] sm:$0xff]
        %v1053 = vld [vmem:[#allocation2 + $0xb2] sm:$0xff]
        %v1054 = vld [vmem:[#allocation2 + $0xc2] sm:$0xff]
        %v1055 = vld [vmem:[#allocation2 + $0xca] sm:$0xff]
        %v1056 = vld [vmem:[#allocation2 + $0xda] sm:$0xff]
        %v1057 = vld [vmem:[#allocation2 + $0xe2] sm:$0xff]
        %v1058 = vld [vmem:[#allocation2 + $0xf2] sm:$0xff]
        %v1059 = vld [vmem:[#allocation2 + $0xfa] sm:$0xff]
        %v1060 = vld [vmem:[#allocation2 + $0x10a] sm:$0xff]
        %v1061 = vld [vmem:[#allocation2 + $0x112] sm:$0xff]
        %v1062 = vld [vmem:[#allocation2 + $0x122] sm:$0xff]
        %v1063 = vld [vmem:[#allocation2 + $0x12a] sm:$0xff]
        %v1064 = vld [vmem:[#allocation2 + $0x13a] sm:$0xff]
        %v1065 = vld [vmem:[#allocation2 + $0x142] sm:$0xff]
        %v1066 = vld [vmem:[#allocation2 + $0x152] sm:$0xff]
        %v1067 = vld [vmem:[#allocation2 + $0x15a] sm:$0xff]
        %v1068 = vld [vmem:[#allocation2 + $0x16a] sm:$0xff]
        %v1069 = vld [vmem:[#allocation2 + $0x172] sm:$0xff]
        %v1070 = vlaneseq
        %v1071 = vshrl.u32 %v1070, 7
        %v1072 = vsub.s32 2, %v1071
        %v1073 = vrot.slane %v835, %v1072
        %v1074 = vmul.f32 %v1038, %v1073
        %v1075 = vmul.f32 %v1039, %v1073
        %v1076 = vmul.f32 %v1040, %v1073
        %v1077 = vmul.f32 %v1041, %v1073
        %v1078 = vmul.f32 %v1042, %v1073
        %v1079 = vmul.f32 %v1043, %v1073
        %v1080 = vmul.f32 %v1044, %v1073
        %v1081 = vmul.f32 %v1045, %v1073
        %v1082 = vmul.f32 %v1046, %v1073
        %v1083 = vmul.f32 %v1047, %v1073
        %v1084 = vmul.f32 %v1048, %v1073
        %v1085 = vmul.f32 %v1049, %v1073
        %v1086 = vmul.f32 %v1050, %v1073
        %v1087 = vmul.f32 %v1051, %v1073
        %v1088 = vmul.f32 %v1052, %v1073
        %v1089 = vmul.f32 %v1053, %v1073
        %v1090 = vmul.f32 %v1054, %v1073
        %v1091 = vmul.f32 %v1055, %v1073
        %v1092 = vmul.f32 %v1056, %v1073
        %v1093 = vmul.f32 %v1057, %v1073
        %v1094 = vmul.f32 %v1058, %v1073
        %v1095 = vmul.f32 %v1059, %v1073
        %v1096 = vmul.f32 %v1060, %v1073
        %v1097 = vmul.f32 %v1061, %v1073
        %v1098 = vmul.f32 %v1062, %v1073
        %v1099 = vmul.f32 %v1063, %v1073
        %v1100 = vmul.f32 %v1064, %v1073
        %v1101 = vmul.f32 %v1065, %v1073
        %v1102 = vmul.f32 %v1066, %v1073
        %v1103 = vmul.f32 %v1067, %v1073
        %v1104 = vmul.f32 %v1068, %v1073
        %v1105 = vmul.f32 %v1069, %v1073
        %v1106 = vadd.f32 %v1006, %v1074
        %v1107 = vadd.f32 %v1007, %v1075
        %v1108 = vadd.f32 %v1008, %v1076
        %v1109 = vadd.f32 %v1009, %v1077
        %v1110 = vadd.f32 %v1010, %v1078
        %v1111 = vadd.f32 %v1011, %v1079
        %v1112 = vadd.f32 %v1012, %v1080
        %v1113 = vadd.f32 %v1013, %v1081
        %v1114 = vadd.f32 %v1014, %v1082
        %v1115 = vadd.f32 %v1015, %v1083
        %v1116 = vadd.f32 %v1016, %v1084
        %v1117 = vadd.f32 %v1017, %v1085
        %v1118 = vadd.f32 %v1018, %v1086
        %v1119 = vadd.f32 %v1019, %v1087
        %v1120 = vadd.f32 %v1020, %v1088
        %v1121 = vadd.f32 %v1021, %v1089
        %v1122 = vadd.f32 %v1022, %v1090
        %v1123 = vadd.f32 %v1023, %v1091
        %v1124 = vadd.f32 %v1024, %v1092
        %v1125 = vadd.f32 %v1025, %v1093
        %v1126 = vadd.f32 %v1026, %v1094
        %v1127 = vadd.f32 %v1027, %v1095
        %v1128 = vadd.f32 %v1028, %v1096
        %v1129 = vadd.f32 %v1029, %v1097
        %v1130 = vadd.f32 %v1030, %v1098
        %v1131 = vadd.f32 %v1031, %v1099
        %v1132 = vadd.f32 %v1032, %v1100
        %v1133 = vadd.f32 %v1033, %v1101
        %v1134 = vadd.f32 %v1034, %v1102
        %v1135 = vadd.f32 %v1035, %v1103
        %v1136 = vadd.f32 %v1036, %v1104
        %v1137 = vadd.f32 %v1037, %v1105
        %v1138 = vld [vmem:[%s802] sm:$0xff]
        %v1139 = vld [vmem:[%s802 + $0x8] sm:$0xff]
        %v1140 = vld [vmem:[%s802 + $0x18] sm:$0xff]
        %v1141 = vld [vmem:[%s802 + $0x20] sm:$0xff]
        %v1142 = vld [vmem:[%s802 + $0x30] sm:$0xff]
        %v1143 = vld [vmem:[%s802 + $0x38] sm:$0xff]
        %v1144 = vld [vmem:[%s802 + $0x48] sm:$0xff]
        %v1145 = vld [vmem:[%s802 + $0x50] sm:$0xff]
        %v1146 = vld [vmem:[%s802 + $0x60] sm:$0xff]
        %v1147 = vld [vmem:[%s802 + $0x68] sm:$0xff]
        %v1148 = vld [vmem:[%s802 + $0x78] sm:$0xff]
        %v1149 = vld [vmem:[%s802 + $0x80] sm:$0xff]
        %v1150 = vld [vmem:[%s802 + $0x90] sm:$0xff]
        %v1151 = vld [vmem:[%s802 + $0x98] sm:$0xff]
        %v1152 = vld [vmem:[%s802 + $0xa8] sm:$0xff]
        %v1153 = vld [vmem:[%s802 + $0xb0] sm:$0xff]
        %v1154 = vld [vmem:[%s802 + $0xc0] sm:$0xff]
        %v1155 = vld [vmem:[%s802 + $0xc8] sm:$0xff]
        %v1156 = vld [vmem:[%s802 + $0xd8] sm:$0xff]
        %v1157 = vld [vmem:[%s802 + $0xe0] sm:$0xff]
        %v1158 = vld [vmem:[%s802 + $0xf0] sm:$0xff]
        %v1159 = vld [vmem:[%s802 + $0xf8] sm:$0xff]
        %v1160 = vld [vmem:[%s802 + $0x108] sm:$0xff]
        %v1161 = vld [vmem:[%s802 + $0x110] sm:$0xff]
        %v1162 = vld [vmem:[%s802 + $0x120] sm:$0xff]
        %v1163 = vld [vmem:[%s802 + $0x128] sm:$0xff]
        %v1164 = vld [vmem:[%s802 + $0x138] sm:$0xff]
        %v1165 = vld [vmem:[%s802 + $0x140] sm:$0xff]
        %v1166 = vld [vmem:[%s802 + $0x150] sm:$0xff]
        %v1167 = vld [vmem:[%s802 + $0x158] sm:$0xff]
        %v1168 = vld [vmem:[%s802 + $0x168] sm:$0xff]
        %v1169 = vld [vmem:[%s802 + $0x170] sm:$0xff]
        %v1170 = vlaneseq
        %v1171 = vshrl.u32 %v1170, 7
        %v1172 = vsub.s32 0, %v1171
        %v1173 = vrot.slane %v836, %v1172
        %v1174 = vmul.f32 %v1138, %v1173
        %v1175 = vmul.f32 %v1139, %v1173
        %v1176 = vmul.f32 %v1140, %v1173
        %v1177 = vmul.f32 %v1141, %v1173
        %v1178 = vmul.f32 %v1142, %v1173
        %v1179 = vmul.f32 %v1143, %v1173
        %v1180 = vmul.f32 %v1144, %v1173
        %v1181 = vmul.f32 %v1145, %v1173
        %v1182 = vmul.f32 %v1146, %v1173
        %v1183 = vmul.f32 %v1147, %v1173
        %v1184 = vmul.f32 %v1148, %v1173
        %v1185 = vmul.f32 %v1149, %v1173
        %v1186 = vmul.f32 %v1150, %v1173
        %v1187 = vmul.f32 %v1151, %v1173
        %v1188 = vmul.f32 %v1152, %v1173
        %v1189 = vmul.f32 %v1153, %v1173
        %v1190 = vmul.f32 %v1154, %v1173
        %v1191 = vmul.f32 %v1155, %v1173
        %v1192 = vmul.f32 %v1156, %v1173
        %v1193 = vmul.f32 %v1157, %v1173
        %v1194 = vmul.f32 %v1158, %v1173
        %v1195 = vmul.f32 %v1159, %v1173
        %v1196 = vmul.f32 %v1160, %v1173
        %v1197 = vmul.f32 %v1161, %v1173
        %v1198 = vmul.f32 %v1162, %v1173
        %v1199 = vmul.f32 %v1163, %v1173
        %v1200 = vmul.f32 %v1164, %v1173
        %v1201 = vmul.f32 %v1165, %v1173
        %v1202 = vmul.f32 %v1166, %v1173
        %v1203 = vmul.f32 %v1167, %v1173
        %v1204 = vmul.f32 %v1168, %v1173
        %v1205 = vmul.f32 %v1169, %v1173
        %v1206 = vadd.f32 %v1106, %v1174
        %v1207 = vadd.f32 %v1107, %v1175
        %v1208 = vadd.f32 %v1108, %v1176
        %v1209 = vadd.f32 %v1109, %v1177
        %v1210 = vadd.f32 %v1110, %v1178
        %v1211 = vadd.f32 %v1111, %v1179
        %v1212 = vadd.f32 %v1112, %v1180
        %v1213 = vadd.f32 %v1113, %v1181
        %v1214 = vadd.f32 %v1114, %v1182
        %v1215 = vadd.f32 %v1115, %v1183
        %v1216 = vadd.f32 %v1116, %v1184
        %v1217 = vadd.f32 %v1117, %v1185
        %v1218 = vadd.f32 %v1118, %v1186
        %v1219 = vadd.f32 %v1119, %v1187
        %v1220 = vadd.f32 %v1120, %v1188
        %v1221 = vadd.f32 %v1121, %v1189
        %v1222 = vadd.f32 %v1122, %v1190
        %v1223 = vadd.f32 %v1123, %v1191
        %v1224 = vadd.f32 %v1124, %v1192
        %v1225 = vadd.f32 %v1125, %v1193
        %v1226 = vadd.f32 %v1126, %v1194
        %v1227 = vadd.f32 %v1127, %v1195
        %v1228 = vadd.f32 %v1128, %v1196
        %v1229 = vadd.f32 %v1129, %v1197
        %v1230 = vadd.f32 %v1130, %v1198
        %v1231 = vadd.f32 %v1131, %v1199
        %v1232 = vadd.f32 %v1132, %v1200
        %v1233 = vadd.f32 %v1133, %v1201
        %v1234 = vadd.f32 %v1134, %v1202
        %v1235 = vadd.f32 %v1135, %v1203
        %v1236 = vadd.f32 %v1136, %v1204
        %v1237 = vadd.f32 %v1137, %v1205
        %v1238 = vld [vmem:[%s802 + $0x1] sm:$0xff]
        %v1239 = vld [vmem:[%s802 + $0x9] sm:$0xff]
        %v1240 = vld [vmem:[%s802 + $0x19] sm:$0xff]
        %v1241 = vld [vmem:[%s802 + $0x21] sm:$0xff]
        %v1242 = vld [vmem:[%s802 + $0x31] sm:$0xff]
        %v1243 = vld [vmem:[%s802 + $0x39] sm:$0xff]
        %v1244 = vld [vmem:[%s802 + $0x49] sm:$0xff]
        %v1245 = vld [vmem:[%s802 + $0x51] sm:$0xff]
        %v1246 = vld [vmem:[%s802 + $0x61] sm:$0xff]
        %v1247 = vld [vmem:[%s802 + $0x69] sm:$0xff]
        %v1248 = vld [vmem:[%s802 + $0x79] sm:$0xff]
        %v1249 = vld [vmem:[%s802 + $0x81] sm:$0xff]
        %v1250 = vld [vmem:[%s802 + $0x91] sm:$0xff]
        %v1251 = vld [vmem:[%s802 + $0x99] sm:$0xff]
        %v1252 = vld [vmem:[%s802 + $0xa9] sm:$0xff]
        %v1253 = vld [vmem:[%s802 + $0xb1] sm:$0xff]
        %v1254 = vld [vmem:[%s802 + $0xc1] sm:$0xff]
        %v1255 = vld [vmem:[%s802 + $0xc9] sm:$0xff]
        %v1256 = vld [vmem:[%s802 + $0xd9] sm:$0xff]
        %v1257 = vld [vmem:[%s802 + $0xe1] sm:$0xff]
        %v1258 = vld [vmem:[%s802 + $0xf1] sm:$0xff]
        %v1259 = vld [vmem:[%s802 + $0xf9] sm:$0xff]
        %v1260 = vld [vmem:[%s802 + $0x109] sm:$0xff]
        %v1261 = vld [vmem:[%s802 + $0x111] sm:$0xff]
        %v1262 = vld [vmem:[%s802 + $0x121] sm:$0xff]
        %v1263 = vld [vmem:[%s802 + $0x129] sm:$0xff]
        %v1264 = vld [vmem:[%s802 + $0x139] sm:$0xff]
        %v1265 = vld [vmem:[%s802 + $0x141] sm:$0xff]
        %v1266 = vld [vmem:[%s802 + $0x151] sm:$0xff]
        %v1267 = vld [vmem:[%s802 + $0x159] sm:$0xff]
        %v1268 = vld [vmem:[%s802 + $0x169] sm:$0xff]
        %v1269 = vld [vmem:[%s802 + $0x171] sm:$0xff]
        %v1270 = vlaneseq
        %v1271 = vshrl.u32 %v1270, 7
        %v1272 = vsub.s32 1, %v1271
        %v1273 = vrot.slane %v836, %v1272
        %v1274 = vmul.f32 %v1238, %v1273
        %v1275 = vmul.f32 %v1239, %v1273
        %v1276 = vmul.f32 %v1240, %v1273
        %v1277 = vmul.f32 %v1241, %v1273
        %v1278 = vmul.f32 %v1242, %v1273
        %v1279 = vmul.f32 %v1243, %v1273
        %v1280 = vmul.f32 %v1244, %v1273
        %v1281 = vmul.f32 %v1245, %v1273
        %v1282 = vmul.f32 %v1246, %v1273
        %v1283 = vmul.f32 %v1247, %v1273
        %v1284 = vmul.f32 %v1248, %v1273
        %v1285 = vmul.f32 %v1249, %v1273
        %v1286 = vmul.f32 %v1250, %v1273
        %v1287 = vmul.f32 %v1251, %v1273
        %v1288 = vmul.f32 %v1252, %v1273
        %v1289 = vmul.f32 %v1253, %v1273
        %v1290 = vmul.f32 %v1254, %v1273
        %v1291 = vmul.f32 %v1255, %v1273
        %v1292 = vmul.f32 %v1256, %v1273
        %v1293 = vmul.f32 %v1257, %v1273
        %v1294 = vmul.f32 %v1258, %v1273
        %v1295 = vmul.f32 %v1259, %v1273
        %v1296 = vmul.f32 %v1260, %v1273
        %v1297 = vmul.f32 %v1261, %v1273
        %v1298 = vmul.f32 %v1262, %v1273
        %v1299 = vmul.f32 %v1263, %v1273
        %v1300 = vmul.f32 %v1264, %v1273
        %v1301 = vmul.f32 %v1265, %v1273
        %v1302 = vmul.f32 %v1266, %v1273
        %v1303 = vmul.f32 %v1267, %v1273
        %v1304 = vmul.f32 %v1268, %v1273
        %v1305 = vmul.f32 %v1269, %v1273
        %v1306 = vadd.f32 %v1206, %v1274
        %v1307 = vadd.f32 %v1207, %v1275
        %v1308 = vadd.f32 %v1208, %v1276
        %v1309 = vadd.f32 %v1209, %v1277
        %v1310 = vadd.f32 %v1210, %v1278
        %v1311 = vadd.f32 %v1211, %v1279
        %v1312 = vadd.f32 %v1212, %v1280
        %v1313 = vadd.f32 %v1213, %v1281
        %v1314 = vadd.f32 %v1214, %v1282
        %v1315 = vadd.f32 %v1215, %v1283
        %v1316 = vadd.f32 %v1216, %v1284
        %v1317 = vadd.f32 %v1217, %v1285
        %v1318 = vadd.f32 %v1218, %v1286
        %v1319 = vadd.f32 %v1219, %v1287
        %v1320 = vadd.f32 %v1220, %v1288
        %v1321 = vadd.f32 %v1221, %v1289
        %v1322 = vadd.f32 %v1222, %v1290
        %v1323 = vadd.f32 %v1223, %v1291
        %v1324 = vadd.f32 %v1224, %v1292
        %v1325 = vadd.f32 %v1225, %v1293
        %v1326 = vadd.f32 %v1226, %v1294
        %v1327 = vadd.f32 %v1227, %v1295
        %v1328 = vadd.f32 %v1228, %v1296
        %v1329 = vadd.f32 %v1229, %v1297
        %v1330 = vadd.f32 %v1230, %v1298
        %v1331 = vadd.f32 %v1231, %v1299
        %v1332 = vadd.f32 %v1232, %v1300
        %v1333 = vadd.f32 %v1233, %v1301
        %v1334 = vadd.f32 %v1234, %v1302
        %v1335 = vadd.f32 %v1235, %v1303
        %v1336 = vadd.f32 %v1236, %v1304
        %v1337 = vadd.f32 %v1237, %v1305
        %v1338 = vld [vmem:[%s802 + $0x2] sm:$0xff]
        %v1339 = vld [vmem:[%s802 + $0xa] sm:$0xff]
        %v1340 = vld [vmem:[%s802 + $0x1a] sm:$0xff]
        %v1341 = vld [vmem:[%s802 + $0x22] sm:$0xff]
        %v1342 = vld [vmem:[%s802 + $0x32] sm:$0xff]
        %v1343 = vld [vmem:[%s802 + $0x3a] sm:$0xff]
        %v1344 = vld [vmem:[%s802 + $0x4a] sm:$0xff]
        %v1345 = vld [vmem:[%s802 + $0x52] sm:$0xff]
        %v1346 = vld [vmem:[%s802 + $0x62] sm:$0xff]
        %v1347 = vld [vmem:[%s802 + $0x6a] sm:$0xff]
        %v1348 = vld [vmem:[%s802 + $0x7a] sm:$0xff]
        %v1349 = vld [vmem:[%s802 + $0x82] sm:$0xff]
        %v1350 = vld [vmem:[%s802 + $0x92] sm:$0xff]
        %v1351 = vld [vmem:[%s802 + $0x9a] sm:$0xff]
        %v1352 = vld [vmem:[%s802 + $0xaa] sm:$0xff]
        %v1353 = vld [vmem:[%s802 + $0xb2] sm:$0xff]
        %v1354 = vld [vmem:[%s802 + $0xc2] sm:$0xff]
        %v1355 = vld [vmem:[%s802 + $0xca] sm:$0xff]
        %v1356 = vld [vmem:[%s802 + $0xda] sm:$0xff]
        %v1357 = vld [vmem:[%s802 + $0xe2] sm:$0xff]
        %v1358 = vld [vmem:[%s802 + $0xf2] sm:$0xff]
        %v1359 = vld [vmem:[%s802 + $0xfa] sm:$0xff]
        %v1360 = vld [vmem:[%s802 + $0x10a] sm:$0xff]
        %v1361 = vld [vmem:[%s802 + $0x112] sm:$0xff]
        %v1362 = vld [vmem:[%s802 + $0x122] sm:$0xff]
        %v1363 = vld [vmem:[%s802 + $0x12a] sm:$0xff]
        %v1364 = vld [vmem:[%s802 + $0x13a] sm:$0xff]
        %v1365 = vld [vmem:[%s802 + $0x142] sm:$0xff]
        %v1366 = vld [vmem:[%s802 + $0x152] sm:$0xff]
        %v1367 = vld [vmem:[%s802 + $0x15a] sm:$0xff]
        %v1368 = vld [vmem:[%s802 + $0x16a] sm:$0xff]
        %v1369 = vld [vmem:[%s802 + $0x172] sm:$0xff]
        %v1370 = vlaneseq
        %v1371 = vshrl.u32 %v1370, 7
        %v1372 = vsub.s32 2, %v1371
        %v1373 = vrot.slane %v836, %v1372
        %v1374 = vmul.f32 %v1338, %v1373
        %v1375 = vmul.f32 %v1339, %v1373
        %v1376 = vmul.f32 %v1340, %v1373
        %v1377 = vmul.f32 %v1341, %v1373
        %v1378 = vmul.f32 %v1342, %v1373
        %v1379 = vmul.f32 %v1343, %v1373
        %v1380 = vmul.f32 %v1344, %v1373
        %v1381 = vmul.f32 %v1345, %v1373
        %v1382 = vmul.f32 %v1346, %v1373
        %v1383 = vmul.f32 %v1347, %v1373
        %v1384 = vmul.f32 %v1348, %v1373
        %v1385 = vmul.f32 %v1349, %v1373
        %v1386 = vmul.f32 %v1350, %v1373
        %v1387 = vmul.f32 %v1351, %v1373
        %v1388 = vmul.f32 %v1352, %v1373
        %v1389 = vmul.f32 %v1353, %v1373
        %v1390 = vmul.f32 %v1354, %v1373
        %v1391 = vmul.f32 %v1355, %v1373
        %v1392 = vmul.f32 %v1356, %v1373
        %v1393 = vmul.f32 %v1357, %v1373
        %v1394 = vmul.f32 %v1358, %v1373
        %v1395 = vmul.f32 %v1359, %v1373
        %v1396 = vmul.f32 %v1360, %v1373
        %v1397 = vmul.f32 %v1361, %v1373
        %v1398 = vmul.f32 %v1362, %v1373
        %v1399 = vmul.f32 %v1363, %v1373
        %v1400 = vmul.f32 %v1364, %v1373
        %v1401 = vmul.f32 %v1365, %v1373
        %v1402 = vmul.f32 %v1366, %v1373
        %v1403 = vmul.f32 %v1367, %v1373
        %v1404 = vmul.f32 %v1368, %v1373
        %v1405 = vmul.f32 %v1369, %v1373
        %v1406 = vadd.f32 %v1306, %v1374
        %v1407 = vadd.f32 %v1307, %v1375
        %v1408 = vadd.f32 %v1308, %v1376
        %v1409 = vadd.f32 %v1309, %v1377
        %v1410 = vadd.f32 %v1310, %v1378
        %v1411 = vadd.f32 %v1311, %v1379
        %v1412 = vadd.f32 %v1312, %v1380
        %v1413 = vadd.f32 %v1313, %v1381
        %v1414 = vadd.f32 %v1314, %v1382
        %v1415 = vadd.f32 %v1315, %v1383
        %v1416 = vadd.f32 %v1316, %v1384
        %v1417 = vadd.f32 %v1317, %v1385
        %v1418 = vadd.f32 %v1318, %v1386
        %v1419 = vadd.f32 %v1319, %v1387
        %v1420 = vadd.f32 %v1320, %v1388
        %v1421 = vadd.f32 %v1321, %v1389
        %v1422 = vadd.f32 %v1322, %v1390
        %v1423 = vadd.f32 %v1323, %v1391
        %v1424 = vadd.f32 %v1324, %v1392
        %v1425 = vadd.f32 %v1325, %v1393
        %v1426 = vadd.f32 %v1326, %v1394
        %v1427 = vadd.f32 %v1327, %v1395
        %v1428 = vadd.f32 %v1328, %v1396
        %v1429 = vadd.f32 %v1329, %v1397
        %v1430 = vadd.f32 %v1330, %v1398
        %v1431 = vadd.f32 %v1331, %v1399
        %v1432 = vadd.f32 %v1332, %v1400
        %v1433 = vadd.f32 %v1333, %v1401
        %v1434 = vadd.f32 %v1334, %v1402
        %v1435 = vadd.f32 %v1335, %v1403
        %v1436 = vadd.f32 %v1336, %v1404
        %v1437 = vadd.f32 %v1337, %v1405
        %s1438 = scalar_lea.vmem [#allocation2], 48
        %v1439 = vld [vmem:[%s1438] sm:$0xff]
        %v1440 = vld [vmem:[%s1438 + $0x8] sm:$0xff]
        %v1441 = vld [vmem:[%s1438 + $0x18] sm:$0xff]
        %v1442 = vld [vmem:[%s1438 + $0x20] sm:$0xff]
        %v1443 = vld [vmem:[%s1438 + $0x30] sm:$0xff]
        %v1444 = vld [vmem:[%s1438 + $0x38] sm:$0xff]
        %v1445 = vld [vmem:[%s1438 + $0x48] sm:$0xff]
        %v1446 = vld [vmem:[%s1438 + $0x50] sm:$0xff]
        %v1447 = vld [vmem:[%s1438 + $0x60] sm:$0xff]
        %v1448 = vld [vmem:[%s1438 + $0x68] sm:$0xff]
        %v1449 = vld [vmem:[%s1438 + $0x78] sm:$0xff]
        %v1450 = vld [vmem:[%s1438 + $0x80] sm:$0xff]
        %v1451 = vld [vmem:[%s1438 + $0x90] sm:$0xff]
        %v1452 = vld [vmem:[%s1438 + $0x98] sm:$0xff]
        %v1453 = vld [vmem:[%s1438 + $0xa8] sm:$0xff]
        %v1454 = vld [vmem:[%s1438 + $0xb0] sm:$0xff]
        %v1455 = vld [vmem:[%s1438 + $0xc0] sm:$0xff]
        %v1456 = vld [vmem:[%s1438 + $0xc8] sm:$0xff]
        %v1457 = vld [vmem:[%s1438 + $0xd8] sm:$0xff]
        %v1458 = vld [vmem:[%s1438 + $0xe0] sm:$0xff]
        %v1459 = vld [vmem:[%s1438 + $0xf0] sm:$0xff]
        %v1460 = vld [vmem:[%s1438 + $0xf8] sm:$0xff]
        %v1461 = vld [vmem:[%s1438 + $0x108] sm:$0xff]
        %v1462 = vld [vmem:[%s1438 + $0x110] sm:$0xff]
        %v1463 = vld [vmem:[%s1438 + $0x120] sm:$0xff]
        %v1464 = vld [vmem:[%s1438 + $0x128] sm:$0xff]
        %v1465 = vld [vmem:[%s1438 + $0x138] sm:$0xff]
        %v1466 = vld [vmem:[%s1438 + $0x140] sm:$0xff]
        %v1467 = vld [vmem:[%s1438 + $0x150] sm:$0xff]
        %v1468 = vld [vmem:[%s1438 + $0x158] sm:$0xff]
        %v1469 = vld [vmem:[%s1438 + $0x168] sm:$0xff]
        %v1470 = vld [vmem:[%s1438 + $0x170] sm:$0xff]
        %v1471 = vlaneseq
        %v1472 = vshrl.u32 %v1471, 7
        %v1473 = vsub.s32 0, %v1472
        %v1474 = vrot.slane %v837, %v1473
        %v1475 = vmul.f32 %v1439, %v1474
        %v1476 = vmul.f32 %v1440, %v1474
        %v1477 = vmul.f32 %v1441, %v1474
        %v1478 = vmul.f32 %v1442, %v1474
        %v1479 = vmul.f32 %v1443, %v1474
        %v1480 = vmul.f32 %v1444, %v1474
        %v1481 = vmul.f32 %v1445, %v1474
        %v1482 = vmul.f32 %v1446, %v1474
        %v1483 = vmul.f32 %v1447, %v1474
        %v1484 = vmul.f32 %v1448, %v1474
        %v1485 = vmul.f32 %v1449, %v1474
        %v1486 = vmul.f32 %v1450, %v1474
        %v1487 = vmul.f32 %v1451, %v1474
        %v1488 = vmul.f32 %v1452, %v1474
        %v1489 = vmul.f32 %v1453, %v1474
        %v1490 = vmul.f32 %v1454, %v1474
        %v1491 = vmul.f32 %v1455, %v1474
        %v1492 = vmul.f32 %v1456, %v1474
        %v1493 = vmul.f32 %v1457, %v1474
        %v1494 = vmul.f32 %v1458, %v1474
        %v1495 = vmul.f32 %v1459, %v1474
        %v1496 = vmul.f32 %v1460, %v1474
        %v1497 = vmul.f32 %v1461, %v1474
        %v1498 = vmul.f32 %v1462, %v1474
        %v1499 = vmul.f32 %v1463, %v1474
        %v1500 = vmul.f32 %v1464, %v1474
        %v1501 = vmul.f32 %v1465, %v1474
        %v1502 = vmul.f32 %v1466, %v1474
        %v1503 = vmul.f32 %v1467, %v1474
        %v1504 = vmul.f32 %v1468, %v1474
        %v1505 = vmul.f32 %v1469, %v1474
        %v1506 = vmul.f32 %v1470, %v1474
        %v1507 = vadd.f32 %v1406, %v1475
        %v1508 = vadd.f32 %v1407, %v1476
        %v1509 = vadd.f32 %v1408, %v1477
        %v1510 = vadd.f32 %v1409, %v1478
        %v1511 = vadd.f32 %v1410, %v1479
        %v1512 = vadd.f32 %v1411, %v1480
        %v1513 = vadd.f32 %v1412, %v1481
        %v1514 = vadd.f32 %v1413, %v1482
        %v1515 = vadd.f32 %v1414, %v1483
        %v1516 = vadd.f32 %v1415, %v1484
        %v1517 = vadd.f32 %v1416, %v1485
        %v1518 = vadd.f32 %v1417, %v1486
        %v1519 = vadd.f32 %v1418, %v1487
        %v1520 = vadd.f32 %v1419, %v1488
        %v1521 = vadd.f32 %v1420, %v1489
        %v1522 = vadd.f32 %v1421, %v1490
        %v1523 = vadd.f32 %v1422, %v1491
        %v1524 = vadd.f32 %v1423, %v1492
        %v1525 = vadd.f32 %v1424, %v1493
        %v1526 = vadd.f32 %v1425, %v1494
        %v1527 = vadd.f32 %v1426, %v1495
        %v1528 = vadd.f32 %v1427, %v1496
        %v1529 = vadd.f32 %v1428, %v1497
        %v1530 = vadd.f32 %v1429, %v1498
        %v1531 = vadd.f32 %v1430, %v1499
        %v1532 = vadd.f32 %v1431, %v1500
        %v1533 = vadd.f32 %v1432, %v1501
        %v1534 = vadd.f32 %v1433, %v1502
        %v1535 = vadd.f32 %v1434, %v1503
        %v1536 = vadd.f32 %v1435, %v1504
        %v1537 = vadd.f32 %v1436, %v1505
        %v1538 = vadd.f32 %v1437, %v1506
        %v1539 = vld [vmem:[%s1438 + $0x1] sm:$0xff]
        %v1540 = vld [vmem:[%s1438 + $0x9] sm:$0xff]
        %v1541 = vld [vmem:[%s1438 + $0x19] sm:$0xff]
        %v1542 = vld [vmem:[%s1438 + $0x21] sm:$0xff]
        %v1543 = vld [vmem:[%s1438 + $0x31] sm:$0xff]
        %v1544 = vld [vmem:[%s1438 + $0x39] sm:$0xff]
        %v1545 = vld [vmem:[%s1438 + $0x49] sm:$0xff]
        %v1546 = vld [vmem:[%s1438 + $0x51] sm:$0xff]
        %v1547 = vld [vmem:[%s1438 + $0x61] sm:$0xff]
        %v1548 = vld [vmem:[%s1438 + $0x69] sm:$0xff]
        %v1549 = vld [vmem:[%s1438 + $0x79] sm:$0xff]
        %v1550 = vld [vmem:[%s1438 + $0x81] sm:$0xff]
        %v1551 = vld [vmem:[%s1438 + $0x91] sm:$0xff]
        %v1552 = vld [vmem:[%s1438 + $0x99] sm:$0xff]
        %v1553 = vld [vmem:[%s1438 + $0xa9] sm:$0xff]
        %v1554 = vld [vmem:[%s1438 + $0xb1] sm:$0xff]
        %v1555 = vld [vmem:[%s1438 + $0xc1] sm:$0xff]
        %v1556 = vld [vmem:[%s1438 + $0xc9] sm:$0xff]
        %v1557 = vld [vmem:[%s1438 + $0xd9] sm:$0xff]
        %v1558 = vld [vmem:[%s1438 + $0xe1] sm:$0xff]
        %v1559 = vld [vmem:[%s1438 + $0xf1] sm:$0xff]
        %v1560 = vld [vmem:[%s1438 + $0xf9] sm:$0xff]
        %v1561 = vld [vmem:[%s1438 + $0x109] sm:$0xff]
        %v1562 = vld [vmem:[%s1438 + $0x111] sm:$0xff]
        %v1563 = vld [vmem:[%s1438 + $0x121] sm:$0xff]
        %v1564 = vld [vmem:[%s1438 + $0x129] sm:$0xff]
        %v1565 = vld [vmem:[%s1438 + $0x139] sm:$0xff]
        %v1566 = vld [vmem:[%s1438 + $0x141] sm:$0xff]
        %v1567 = vld [vmem:[%s1438 + $0x151] sm:$0xff]
        %v1568 = vld [vmem:[%s1438 + $0x159] sm:$0xff]
        %v1569 = vld [vmem:[%s1438 + $0x169] sm:$0xff]
        %v1570 = vld [vmem:[%s1438 + $0x171] sm:$0xff]
        %v1571 = vlaneseq
        %v1572 = vshrl.u32 %v1571, 7
        %v1573 = vsub.s32 1, %v1572
        %v1574 = vrot.slane %v837, %v1573
        %v1575 = vmul.f32 %v1539, %v1574
        %v1576 = vmul.f32 %v1540, %v1574
        %v1577 = vmul.f32 %v1541, %v1574
        %v1578 = vmul.f32 %v1542, %v1574
        %v1579 = vmul.f32 %v1543, %v1574
        %v1580 = vmul.f32 %v1544, %v1574
        %v1581 = vmul.f32 %v1545, %v1574
        %v1582 = vmul.f32 %v1546, %v1574
        %v1583 = vmul.f32 %v1547, %v1574
        %v1584 = vmul.f32 %v1548, %v1574
        %v1585 = vmul.f32 %v1549, %v1574
        %v1586 = vmul.f32 %v1550, %v1574
        %v1587 = vmul.f32 %v1551, %v1574
        %v1588 = vmul.f32 %v1552, %v1574
        %v1589 = vmul.f32 %v1553, %v1574
        %v1590 = vmul.f32 %v1554, %v1574
        %v1591 = vmul.f32 %v1555, %v1574
        %v1592 = vmul.f32 %v1556, %v1574
        %v1593 = vmul.f32 %v1557, %v1574
        %v1594 = vmul.f32 %v1558, %v1574
        %v1595 = vmul.f32 %v1559, %v1574
        %v1596 = vmul.f32 %v1560, %v1574
        %v1597 = vmul.f32 %v1561, %v1574
        %v1598 = vmul.f32 %v1562, %v1574
        %v1599 = vmul.f32 %v1563, %v1574
        %v1600 = vmul.f32 %v1564, %v1574
        %v1601 = vmul.f32 %v1565, %v1574
        %v1602 = vmul.f32 %v1566, %v1574
        %v1603 = vmul.f32 %v1567, %v1574
        %v1604 = vmul.f32 %v1568, %v1574
        %v1605 = vmul.f32 %v1569, %v1574
        %v1606 = vmul.f32 %v1570, %v1574
        %v1607 = vadd.f32 %v1507, %v1575
        %v1608 = vadd.f32 %v1508, %v1576
        %v1609 = vadd.f32 %v1509, %v1577
        %v1610 = vadd.f32 %v1510, %v1578
        %v1611 = vadd.f32 %v1511, %v1579
        %v1612 = vadd.f32 %v1512, %v1580
        %v1613 = vadd.f32 %v1513, %v1581
        %v1614 = vadd.f32 %v1514, %v1582
        %v1615 = vadd.f32 %v1515, %v1583
        %v1616 = vadd.f32 %v1516, %v1584
        %v1617 = vadd.f32 %v1517, %v1585
        %v1618 = vadd.f32 %v1518, %v1586
        %v1619 = vadd.f32 %v1519, %v1587
        %v1620 = vadd.f32 %v1520, %v1588
        %v1621 = vadd.f32 %v1521, %v1589
        %v1622 = vadd.f32 %v1522, %v1590
        %v1623 = vadd.f32 %v1523, %v1591
        %v1624 = vadd.f32 %v1524, %v1592
        %v1625 = vadd.f32 %v1525, %v1593
        %v1626 = vadd.f32 %v1526, %v1594
        %v1627 = vadd.f32 %v1527, %v1595
        %v1628 = vadd.f32 %v1528, %v1596
        %v1629 = vadd.f32 %v1529, %v1597
        %v1630 = vadd.f32 %v1530, %v1598
        %v1631 = vadd.f32 %v1531, %v1599
        %v1632 = vadd.f32 %v1532, %v1600
        %v1633 = vadd.f32 %v1533, %v1601
        %v1634 = vadd.f32 %v1534, %v1602
        %v1635 = vadd.f32 %v1535, %v1603
        %v1636 = vadd.f32 %v1536, %v1604
        %v1637 = vadd.f32 %v1537, %v1605
        %v1638 = vadd.f32 %v1538, %v1606
        %v1639 = vld [vmem:[%s1438 + $0x2] sm:$0xff]
        %v1640 = vld [vmem:[%s1438 + $0xa] sm:$0xff]
        %v1641 = vld [vmem:[%s1438 + $0x1a] sm:$0xff]
        %v1642 = vld [vmem:[%s1438 + $0x22] sm:$0xff]
        %v1643 = vld [vmem:[%s1438 + $0x32] sm:$0xff]
        %v1644 = vld [vmem:[%s1438 + $0x3a] sm:$0xff]
        %v1645 = vld [vmem:[%s1438 + $0x4a] sm:$0xff]
        %v1646 = vld [vmem:[%s1438 + $0x52] sm:$0xff]
        %v1647 = vld [vmem:[%s1438 + $0x62] sm:$0xff]
        %v1648 = vld [vmem:[%s1438 + $0x6a] sm:$0xff]
        %v1649 = vld [vmem:[%s1438 + $0x7a] sm:$0xff]
        %v1650 = vld [vmem:[%s1438 + $0x82] sm:$0xff]
        %v1651 = vld [vmem:[%s1438 + $0x92] sm:$0xff]
        %v1652 = vld [vmem:[%s1438 + $0x9a] sm:$0xff]
        %v1653 = vld [vmem:[%s1438 + $0xaa] sm:$0xff]
        %v1654 = vld [vmem:[%s1438 + $0xb2] sm:$0xff]
        %v1655 = vld [vmem:[%s1438 + $0xc2] sm:$0xff]
        %v1656 = vld [vmem:[%s1438 + $0xca] sm:$0xff]
        %v1657 = vld [vmem:[%s1438 + $0xda] sm:$0xff]
        %v1658 = vld [vmem:[%s1438 + $0xe2] sm:$0xff]
        %v1659 = vld [vmem:[%s1438 + $0xf2] sm:$0xff]
        %v1660 = vld [vmem:[%s1438 + $0xfa] sm:$0xff]
        %v1661 = vld [vmem:[%s1438 + $0x10a] sm:$0xff]
        %v1662 = vld [vmem:[%s1438 + $0x112] sm:$0xff]
        %v1663 = vld [vmem:[%s1438 + $0x122] sm:$0xff]
        %v1664 = vld [vmem:[%s1438 + $0x12a] sm:$0xff]
        %v1665 = vld [vmem:[%s1438 + $0x13a] sm:$0xff]
        %v1666 = vld [vmem:[%s1438 + $0x142] sm:$0xff]
        %v1667 = vld [vmem:[%s1438 + $0x152] sm:$0xff]
        %v1668 = vld [vmem:[%s1438 + $0x15a] sm:$0xff]
        %v1669 = vld [vmem:[%s1438 + $0x16a] sm:$0xff]
        %v1670 = vld [vmem:[%s1438 + $0x172] sm:$0xff]
        %v1671 = vlaneseq
        %v1672 = vshrl.u32 %v1671, 7
        %v1673 = vsub.s32 2, %v1672
        %v1674 = vrot.slane %v837, %v1673
        %v1675 = vmul.f32 %v1639, %v1674
        %v1676 = vmul.f32 %v1640, %v1674
        %v1677 = vmul.f32 %v1641, %v1674
        %v1678 = vmul.f32 %v1642, %v1674
        %v1679 = vmul.f32 %v1643, %v1674
        %v1680 = vmul.f32 %v1644, %v1674
        %v1681 = vmul.f32 %v1645, %v1674
        %v1682 = vmul.f32 %v1646, %v1674
        %v1683 = vmul.f32 %v1647, %v1674
        %v1684 = vmul.f32 %v1648, %v1674
        %v1685 = vmul.f32 %v1649, %v1674
        %v1686 = vmul.f32 %v1650, %v1674
        %v1687 = vmul.f32 %v1651, %v1674
        %v1688 = vmul.f32 %v1652, %v1674
        %v1689 = vmul.f32 %v1653, %v1674
        %v1690 = vmul.f32 %v1654, %v1674
        %v1691 = vmul.f32 %v1655, %v1674
        %v1692 = vmul.f32 %v1656, %v1674
        %v1693 = vmul.f32 %v1657, %v1674
        %v1694 = vmul.f32 %v1658, %v1674
        %v1695 = vmul.f32 %v1659, %v1674
        %v1696 = vmul.f32 %v1660, %v1674
        %v1697 = vmul.f32 %v1661, %v1674
        %v1698 = vmul.f32 %v1662, %v1674
        %v1699 = vmul.f32 %v1663, %v1674
        %v1700 = vmul.f32 %v1664, %v1674
        %v1701 = vmul.f32 %v1665, %v1674
        %v1702 = vmul.f32 %v1666, %v1674
        %v1703 = vmul.f32 %v1667, %v1674
        %v1704 = vmul.f32 %v1668, %v1674
        %v1705 = vmul.f32 %v1669, %v1674
        %v1706 = vmul.f32 %v1670, %v1674
        %v1707 = vadd.f32 %v1607, %v1675
        %v1708 = vadd.f32 %v1608, %v1676
        %v1709 = vadd.f32 %v1609, %v1677
        %v1710 = vadd.f32 %v1610, %v1678
        %v1711 = vadd.f32 %v1611, %v1679
        %v1712 = vadd.f32 %v1612, %v1680
        %v1713 = vadd.f32 %v1613, %v1681
        %v1714 = vadd.f32 %v1614, %v1682
        %v1715 = vadd.f32 %v1615, %v1683
        %v1716 = vadd.f32 %v1616, %v1684
        %v1717 = vadd.f32 %v1617, %v1685
        %v1718 = vadd.f32 %v1618, %v1686
        %v1719 = vadd.f32 %v1619, %v1687
        %v1720 = vadd.f32 %v1620, %v1688
        %v1721 = vadd.f32 %v1621, %v1689
        %v1722 = vadd.f32 %v1622, %v1690
        %v1723 = vadd.f32 %v1623, %v1691
        %v1724 = vadd.f32 %v1624, %v1692
        %v1725 = vadd.f32 %v1625, %v1693
        %v1726 = vadd.f32 %v1626, %v1694
        %v1727 = vadd.f32 %v1627, %v1695
        %v1728 = vadd.f32 %v1628, %v1696
        %v1729 = vadd.f32 %v1629, %v1697
        %v1730 = vadd.f32 %v1630, %v1698
        %v1731 = vadd.f32 %v1631, %v1699
        %v1732 = vadd.f32 %v1632, %v1700
        %v1733 = vadd.f32 %v1633, %v1701
        %v1734 = vadd.f32 %v1634, %v1702
        %v1735 = vadd.f32 %v1635, %v1703
        %v1736 = vadd.f32 %v1636, %v1704
        %v1737 = vadd.f32 %v1637, %v1705
        %v1738 = vadd.f32 %v1638, %v1706
        %v1739 = vld [vmem:[%s4] sm:$0x1]
        %v1741 = vlaneseq
        %v1742 = vshrl.u32 %v1741, 7
        %v1743 = vsub.s32 0, %v1742
        %v1744 = vrot.slane %v1739, %v1743
        %v1746 = vadd.f32 %v1707, %v1744
        %v1747 = vadd.f32 %v1708, %v1744
        %v1748 = vadd.f32 %v1709, %v1744
        %v1749 = vadd.f32 %v1710, %v1744
        %v1750 = vadd.f32 %v1711, %v1744
        %v1751 = vadd.f32 %v1712, %v1744
        %v1752 = vadd.f32 %v1713, %v1744
        %v1753 = vadd.f32 %v1714, %v1744
        %v1754 = vadd.f32 %v1715, %v1744
        %v1755 = vadd.f32 %v1716, %v1744
        %v1756 = vadd.f32 %v1717, %v1744
        %v1757 = vadd.f32 %v1718, %v1744
        %v1758 = vadd.f32 %v1719, %v1744
        %v1759 = vadd.f32 %v1720, %v1744
        %v1760 = vadd.f32 %v1721, %v1744
        %v1761 = vadd.f32 %v1722, %v1744
        %v1762 = vadd.f32 %v1723, %v1744
        %v1763 = vadd.f32 %v1724, %v1744
        %v1764 = vadd.f32 %v1725, %v1744
        %v1765 = vadd.f32 %v1726, %v1744
        %v1766 = vadd.f32 %v1727, %v1744
        %v1767 = vadd.f32 %v1728, %v1744
        %v1768 = vadd.f32 %v1729, %v1744
        %v1769 = vadd.f32 %v1730, %v1744
        %v1770 = vadd.f32 %v1731, %v1744
        %v1771 = vadd.f32 %v1732, %v1744
        %v1772 = vadd.f32 %v1733, %v1744
        %v1773 = vadd.f32 %v1734, %v1744
        %v1774 = vadd.f32 %v1735, %v1744
        %v1775 = vadd.f32 %v1736, %v1744
        %v1776 = vadd.f32 %v1737, %v1744
        %v1777 = vadd.f32 %v1738, %v1744
        %v1778 = vmax.f32 %v1746, 0.0
        %v1779 = vmax.f32 %v1747, 0.0
        %v1780 = vmax.f32 %v1748, 0.0
        %v1781 = vmax.f32 %v1749, 0.0
        %v1782 = vmax.f32 %v1750, 0.0
        %v1783 = vmax.f32 %v1751, 0.0
        %v1784 = vmax.f32 %v1752, 0.0
        %v1785 = vmax.f32 %v1753, 0.0
        %v1786 = vmax.f32 %v1754, 0.0
        %v1787 = vmax.f32 %v1755, 0.0
        %v1788 = vmax.f32 %v1756, 0.0
        %v1789 = vmax.f32 %v1757, 0.0
        %v1790 = vmax.f32 %v1758, 0.0
        %v1791 = vmax.f32 %v1759, 0.0
        %v1792 = vmax.f32 %v1760, 0.0
        %v1793 = vmax.f32 %v1761, 0.0
        %v1794 = vmax.f32 %v1762, 0.0
        %v1795 = vmax.f32 %v1763, 0.0
        %v1796 = vmax.f32 %v1764, 0.0
        %v1797 = vmax.f32 %v1765, 0.0
        %v1798 = vmax.f32 %v1766, 0.0
        %v1799 = vmax.f32 %v1767, 0.0
        %v1800 = vmax.f32 %v1768, 0.0
        %v1801 = vmax.f32 %v1769, 0.0
        %v1802 = vmax.f32 %v1770, 0.0
        %v1803 = vmax.f32 %v1771, 0.0
        %v1804 = vmax.f32 %v1772, 0.0
        %v1805 = vmax.f32 %v1773, 0.0
        %v1806 = vmax.f32 %v1774, 0.0
        %v1807 = vmax.f32 %v1775, 0.0
        %v1808 = vmax.f32 %v1776, 0.0
        %v1809 = vmax.f32 %v1777, 0.0
        %v1810 = vld [vmem:[%s5] sm:$0xff]
        %v1811 = vld [vmem:[%s5 + $0x8] sm:$0xff]
        %v1812 = vld [vmem:[%s5 + $0x10] sm:$0xff]
        %v1813 = vld [vmem:[%s5 + $0x18] sm:$0xff]
        %v1814 = vld [vmem:[%s6] sm:$0x1]
        %v1816 = vlaneseq
        %v1817 = vshrl.u32 %v1816, 7
        %v1818 = vsub.s32 0, %v1817
        %v1819 = vrot.slane %v1814, %v1818
        %v1822 = vsel %vm746, %v1778, 0
        %v1825 = vsel %vm746, %v1779, 0
        %v1828 = vsel %vm746, %v1780, 0
        %v1831 = vsel %vm746, %v1781, 0
        %v1834 = vsel %vm746, %v1782, 0
        %v1837 = vsel %vm746, %v1783, 0
        %v1840 = vsel %vm746, %v1784, 0
        %v1843 = vsel %vm746, %v1785, 0
        %v1846 = vsel %vm746, %v1786, 0
        %v1849 = vsel %vm746, %v1787, 0
        %v1852 = vsel %vm746, %v1788, 0
        %v1855 = vsel %vm746, %v1789, 0
        %v1858 = vsel %vm746, %v1790, 0
        %v1861 = vsel %vm746, %v1791, 0
        %v1864 = vsel %vm746, %v1792, 0
        %v1867 = vsel %vm746, %v1793, 0
        %v1870 = vsel %vm746, %v1794, 0
        %v1873 = vsel %vm746, %v1795, 0
        %v1876 = vsel %vm746, %v1796, 0
        %v1879 = vsel %vm746, %v1797, 0
        %v1882 = vsel %vm746, %v1798, 0
        %v1885 = vsel %vm746, %v1799, 0
        %v1888 = vsel %vm746, %v1800, 0
        %v1891 = vsel %vm746, %v1801, 0
        %v1894 = vsel %vm746, %v1802, 0
        %v1897 = vsel %vm746, %v1803, 0
        %v1900 = vsel %vm746, %v1804, 0
        %v1903 = vsel %vm746, %v1805, 0
        %v1906 = vsel %vm746, %v1806, 0
        %v1909 = vsel %vm746, %v1807, 0
        %v1912 = vsel %vm746, %v1808, 0
        %v1915 = vsel %vm746, %v1809, 0
        %1917 = vmatprep.subr.mxu0 0.0
        %1918 = vmatpush1.msra.mxu0 0.0
        %1919 = vmatprep.subr.mxu0 0.0
        %1920 = vmatpush1.msra.mxu0 0.0
        %1921 = vmatprep.subr.mxu0 0.0
        %1922 = vmatpush1.msra.mxu0 0.0
        %1923 = vmatprep.subr.mxu0 0.0
        %1924 = vmatpush1.msra.mxu0 0.0
        %1925 = vmatprep.subr.mxu0 0.0
        %1926 = vmatpush1.msra.mxu0 0.0
        %1927 = vmatprep.subr.mxu0 0.0
        %1928 = vmatpush1.msra.mxu0 0.0
        %1929 = vmatprep.subr.mxu0 0.0
        %1930 = vmatpush1.msra.mxu0 0.0
        %1931 = vmatprep.subr.mxu0 0.0
        %1932 = vmatpush1.msra.mxu0 0.0
        %1933 = vmatprep.subr.mxu0 0.0
        %1934 = vmatpush1.msra.mxu0 0.0
        %1935 = vmatprep.subr.mxu0 0.0
        %1936 = vmatpush1.msra.mxu0 0.0
        %1937 = vmatprep.subr.mxu0 0.0
        %1938 = vmatpush1.msra.mxu0 0.0
        %1939 = vmatprep.subr.mxu0 0.0
        %1940 = vmatpush1.msra.mxu0 0.0
        %1941 = vmatprep.subr.mxu0 0.0
        %1942 = vmatpush1.msra.mxu0 %v1813
        %1943 = vmatprep.subr.mxu0 0.0
        %1944 = vmatpush1.msra.mxu0 %v1812
        %1945 = vmatprep.subr.mxu0 0.0
        %1946 = vmatpush1.msra.mxu0 %v1811
        %1947 = vmatprep.subr.mxu0 0.0
        %1948 = vmatpush1.msra.mxu0 %v1810
        %1949 = vmatprep.subr.mxu0 0.0
        %1950 = vmatpush2.msra.mxu0 0.0
        %1951 = vmatprep.subr.mxu0 0.0
        %1952 = vmatpush2.msra.mxu0 0.0
        %1953 = vmatprep.subr.mxu0 0.0
        %1954 = vmatpush2.msra.mxu0 0.0
        %1955 = vmatprep.subr.mxu0 0.0
        %1956 = vmatpush2.msra.mxu0 0.0
        %1957 = vmatprep.subr.mxu0 0.0
        %1958 = vmatpush2.msra.mxu0 0.0
        %1959 = vmatprep.subr.mxu0 0.0
        %1960 = vmatpush2.msra.mxu0 0.0
        %1961 = vmatprep.subr.mxu0 0.0
        %1962 = vmatpush2.msra.mxu0 0.0
        %1963 = vmatprep.subr.mxu0 0.0
        %1964 = vmatpush2.msra.mxu0 0.0
        %1965 = vmatprep.subr.mxu0 0.0
        %1966 = vmatpush2.msra.mxu0 0.0
        %1967 = vmatprep.subr.mxu0 0.0
        %1968 = vmatpush2.msra.mxu0 0.0
        %1969 = vmatprep.subr.mxu0 0.0
        %1970 = vmatpush2.msra.mxu0 0.0
        %1971 = vmatprep.subr.mxu0 0.0
        %1972 = vmatpush2.msra.mxu0 0.0
        %1973 = vmatprep.subr.mxu0 0.0
        %1974 = vmatpush2.msra.mxu0 0.0
        %1975 = vmatprep.subr.mxu0 0.0
        %1976 = vmatpush2.msra.mxu0 0.0
        %1977 = vmatprep.subr.mxu0 0.0
        %1978 = vmatpush2.msra.mxu0 0.0
        %1979 = vmatprep.subr.mxu0 0.0
        %1980 = vmatpush2.msra.mxu0 0.0
        %1981 = vmatprep.mubr.f32.mxu0 0.0
        %1982 = vmatmul.mubr.f32.gmra.mxu0 %v1822
        %v1983 = vpop.f32.mrf.mxu0
        %v1984 = vadd.f32 %v1819, %v1983
        %v1985 = vpop.f32.mrf.mxu0
        %1986 = vmatprep.mubr.f32.mxu0 0.0
        %1987 = vmatmul.mubr.f32.gmra.mxu0 %v1825
        %v1988 = vpop.f32.mrf.mxu0
        %v1989 = vadd.f32 %v1819, %v1988
        %v1990 = vpop.f32.mrf.mxu0
        %1991 = vmatprep.mubr.f32.mxu0 0.0
        %1992 = vmatmul.mubr.f32.gmra.mxu0 %v1828
        %v1993 = vpop.f32.mrf.mxu0
        %v1994 = vadd.f32 %v1819, %v1993
        %v1995 = vpop.f32.mrf.mxu0
        %1996 = vmatprep.mubr.f32.mxu0 0.0
        %1997 = vmatmul.mubr.f32.gmra.mxu0 %v1831
        %v1998 = vpop.f32.mrf.mxu0
        %v1999 = vadd.f32 %v1819, %v1998
        %v2000 = vpop.f32.mrf.mxu0
        %2001 = vmatprep.mubr.f32.mxu0 0.0
        %2002 = vmatmul.mubr.f32.gmra.mxu0 %v1834
        %v2003 = vpop.f32.mrf.mxu0
        %v2004 = vadd.f32 %v1819, %v2003
        %v2005 = vpop.f32.mrf.mxu0
        %2006 = vmatprep.mubr.f32.mxu0 0.0
        %2007 = vmatmul.mubr.f32.gmra.mxu0 %v1837
        %v2008 = vpop.f32.mrf.mxu0
        %v2009 = vadd.f32 %v1819, %v2008
        %v2010 = vpop.f32.mrf.mxu0
        %2011 = vmatprep.mubr.f32.mxu0 0.0
        %2012 = vmatmul.mubr.f32.gmra.mxu0 %v1840
        %v2013 = vpop.f32.mrf.mxu0
        %v2014 = vadd.f32 %v1819, %v2013
        %v2015 = vpop.f32.mrf.mxu0
        %2016 = vmatprep.mubr.f32.mxu0 0.0
        %2017 = vmatmul.mubr.f32.gmra.mxu0 %v1843
        %v2018 = vpop.f32.mrf.mxu0
        %v2019 = vadd.f32 %v1819, %v2018
        %v2020 = vpop.f32.mrf.mxu0
        %2021 = vmatprep.mubr.f32.mxu0 0.0
        %2022 = vmatmul.mubr.f32.gmra.mxu0 %v1846
        %v2023 = vpop.f32.mrf.mxu0
        %v2024 = vadd.f32 %v1819, %v2023
        %v2025 = vpop.f32.mrf.mxu0
        %2026 = vmatprep.mubr.f32.mxu0 0.0
        %2027 = vmatmul.mubr.f32.gmra.mxu0 %v1849
        %v2028 = vpop.f32.mrf.mxu0
        %v2029 = vadd.f32 %v1819, %v2028
        %v2030 = vpop.f32.mrf.mxu0
        %2031 = vmatprep.mubr.f32.mxu0 0.0
        %2032 = vmatmul.mubr.f32.gmra.mxu0 %v1852
        %v2033 = vpop.f32.mrf.mxu0
        %v2034 = vadd.f32 %v1819, %v2033
        %v2035 = vpop.f32.mrf.mxu0
        %2036 = vmatprep.mubr.f32.mxu0 0.0
        %2037 = vmatmul.mubr.f32.gmra.mxu0 %v1855
        %v2038 = vpop.f32.mrf.mxu0
        %v2039 = vadd.f32 %v1819, %v2038
        %v2040 = vpop.f32.mrf.mxu0
        %2041 = vmatprep.mubr.f32.mxu0 0.0
        %2042 = vmatmul.mubr.f32.gmra.mxu0 %v1858
        %v2043 = vpop.f32.mrf.mxu0
        %v2044 = vadd.f32 %v1819, %v2043
        %v2045 = vpop.f32.mrf.mxu0
        %2046 = vmatprep.mubr.f32.mxu0 0.0
        %2047 = vmatmul.mubr.f32.gmra.mxu0 %v1861
        %v2048 = vpop.f32.mrf.mxu0
        %v2049 = vadd.f32 %v1819, %v2048
        %v2050 = vpop.f32.mrf.mxu0
        %2051 = vmatprep.mubr.f32.mxu0 0.0
        %2052 = vmatmul.mubr.f32.gmra.mxu0 %v1864
        %v2053 = vpop.f32.mrf.mxu0
        %v2054 = vadd.f32 %v1819, %v2053
        %v2055 = vpop.f32.mrf.mxu0
        %2056 = vmatprep.mubr.f32.mxu0 0.0
        %2057 = vmatmul.mubr.f32.gmra.mxu0 %v1867
        %v2058 = vpop.f32.mrf.mxu0
        %v2059 = vadd.f32 %v1819, %v2058
        %v2060 = vpop.f32.mrf.mxu0
        %2061 = vmatprep.mubr.f32.mxu0 0.0
        %2062 = vmatmul.mubr.f32.gmra.mxu0 %v1870
        %v2063 = vpop.f32.mrf.mxu0
        %v2064 = vadd.f32 %v1819, %v2063
        %v2065 = vpop.f32.mrf.mxu0
        %2066 = vmatprep.mubr.f32.mxu0 0.0
        %2067 = vmatmul.mubr.f32.gmra.mxu0 %v1873
        %v2068 = vpop.f32.mrf.mxu0
        %v2069 = vadd.f32 %v1819, %v2068
        %v2070 = vpop.f32.mrf.mxu0
        %2071 = vmatprep.mubr.f32.mxu0 0.0
        %2072 = vmatmul.mubr.f32.gmra.mxu0 %v1876
        %v2073 = vpop.f32.mrf.mxu0
        %v2074 = vadd.f32 %v1819, %v2073
        %v2075 = vpop.f32.mrf.mxu0
        %2076 = vmatprep.mubr.f32.mxu0 0.0
        %2077 = vmatmul.mubr.f32.gmra.mxu0 %v1879
        %v2078 = vpop.f32.mrf.mxu0
        %v2079 = vadd.f32 %v1819, %v2078
        %v2080 = vpop.f32.mrf.mxu0
        %2081 = vmatprep.mubr.f32.mxu0 0.0
        %2082 = vmatmul.mubr.f32.gmra.mxu0 %v1882
        %v2083 = vpop.f32.mrf.mxu0
        %v2084 = vadd.f32 %v1819, %v2083
        %v2085 = vpop.f32.mrf.mxu0
        %2086 = vmatprep.mubr.f32.mxu0 0.0
        %2087 = vmatmul.mubr.f32.gmra.mxu0 %v1885
        %v2088 = vpop.f32.mrf.mxu0
        %v2089 = vadd.f32 %v1819, %v2088
        %v2090 = vpop.f32.mrf.mxu0
        %2091 = vmatprep.mubr.f32.mxu0 0.0
        %2092 = vmatmul.mubr.f32.gmra.mxu0 %v1888
        %v2093 = vpop.f32.mrf.mxu0
        %v2094 = vadd.f32 %v1819, %v2093
        %v2095 = vpop.f32.mrf.mxu0
        %2096 = vmatprep.mubr.f32.mxu0 0.0
        %2097 = vmatmul.mubr.f32.gmra.mxu0 %v1891
        %v2098 = vpop.f32.mrf.mxu0
        %v2099 = vadd.f32 %v1819, %v2098
        %v2100 = vpop.f32.mrf.mxu0
        %2101 = vmatprep.mubr.f32.mxu0 0.0
        %2102 = vmatmul.mubr.f32.gmra.mxu0 %v1894
        %v2103 = vpop.f32.mrf.mxu0
        %v2104 = vadd.f32 %v1819, %v2103
        %v2105 = vpop.f32.mrf.mxu0
        %2106 = vmatprep.mubr.f32.mxu0 0.0
        %2107 = vmatmul.mubr.f32.gmra.mxu0 %v1897
        %v2108 = vpop.f32.mrf.mxu0
        %v2109 = vadd.f32 %v1819, %v2108
        %v2110 = vpop.f32.mrf.mxu0
        %2111 = vmatprep.mubr.f32.mxu0 0.0
        %2112 = vmatmul.mubr.f32.gmra.mxu0 %v1900
        %v2113 = vpop.f32.mrf.mxu0
        %v2114 = vadd.f32 %v1819, %v2113
        %v2115 = vpop.f32.mrf.mxu0
        %2116 = vmatprep.mubr.f32.mxu0 0.0
        %2117 = vmatmul.mubr.f32.gmra.mxu0 %v1903
        %v2118 = vpop.f32.mrf.mxu0
        %v2119 = vadd.f32 %v1819, %v2118
        %v2120 = vpop.f32.mrf.mxu0
        %2121 = vmatprep.mubr.f32.mxu0 0.0
        %2122 = vmatmul.mubr.f32.gmra.mxu0 %v1906
        %v2123 = vpop.f32.mrf.mxu0
        %v2124 = vadd.f32 %v1819, %v2123
        %v2125 = vpop.f32.mrf.mxu0
        %2126 = vmatprep.mubr.f32.mxu0 0.0
        %2127 = vmatmul.mubr.f32.gmra.mxu0 %v1909
        %v2128 = vpop.f32.mrf.mxu0
        %v2129 = vadd.f32 %v1819, %v2128
        %v2130 = vpop.f32.mrf.mxu0
        %2131 = vmatprep.mubr.f32.mxu0 0.0
        %2132 = vmatmul.mubr.f32.gmra.mxu0 %v1912
        %v2133 = vpop.f32.mrf.mxu0
        %v2134 = vadd.f32 %v1819, %v2133
        %v2135 = vpop.f32.mrf.mxu0
        %2136 = vmatprep.mubr.f32.mxu0 0.0
        %2137 = vmatmul.mubr.f32.gmra.mxu0 %v1915
        %v2138 = vpop.f32.mrf.mxu0
        %v2139 = vadd.f32 %v1819, %v2138
        %v2140 = vpop.f32.mrf.mxu0
        %2141 = vdwg.mxu0
        %v2142 = vsel %vm392, %v1984, 0.0
        %v2143 = vsel %vm392, %v1989, 0.0
        %v2144 = vadd.f32 %v2142, %v2143
        %v2145 = vsel %vm392, %v1994, 0.0
        %v2146 = vadd.f32 %v2144, %v2145
        %v2147 = vsel %vm392, %v1999, 0.0
        %v2148 = vadd.f32 %v2146, %v2147
        %v2149 = vsel %vm392, %v2004, 0.0
        %v2150 = vadd.f32 %v2148, %v2149
        %v2151 = vsel %vm392, %v2009, 0.0
        %v2152 = vadd.f32 %v2150, %v2151
        %v2153 = vsel %vm392, %v2014, 0.0
        %v2154 = vadd.f32 %v2152, %v2153
        %v2155 = vsel %vm392, %v2019, 0.0
        %v2156 = vadd.f32 %v2154, %v2155
        %v2157 = vsel %vm392, %v2024, 0.0
        %v2158 = vadd.f32 %v2156, %v2157
        %v2159 = vsel %vm392, %v2029, 0.0
        %v2160 = vadd.f32 %v2158, %v2159
        %v2161 = vsel %vm392, %v2034, 0.0
        %v2162 = vadd.f32 %v2160, %v2161
        %v2163 = vsel %vm392, %v2039, 0.0
        %v2164 = vadd.f32 %v2162, %v2163
        %v2165 = vsel %vm392, %v2044, 0.0
        %v2166 = vadd.f32 %v2164, %v2165
        %v2167 = vsel %vm392, %v2049, 0.0
        %v2168 = vadd.f32 %v2166, %v2167
        %v2169 = vsel %vm392, %v2054, 0.0
        %v2170 = vadd.f32 %v2168, %v2169
        %v2171 = vsel %vm392, %v2059, 0.0
        %v2172 = vadd.f32 %v2170, %v2171
        %v2173 = vsel %vm392, %v2064, 0.0
        %v2174 = vadd.f32 %v2172, %v2173
        %v2175 = vsel %vm392, %v2069, 0.0
        %v2176 = vadd.f32 %v2174, %v2175
        %v2177 = vsel %vm392, %v2074, 0.0
        %v2178 = vadd.f32 %v2176, %v2177
        %v2179 = vsel %vm392, %v2079, 0.0
        %v2180 = vadd.f32 %v2178, %v2179
        %v2181 = vsel %vm392, %v2084, 0.0
        %v2182 = vadd.f32 %v2180, %v2181
        %v2183 = vsel %vm392, %v2089, 0.0
        %v2184 = vadd.f32 %v2182, %v2183
        %v2185 = vsel %vm392, %v2094, 0.0
        %v2186 = vadd.f32 %v2184, %v2185
        %v2187 = vsel %vm392, %v2099, 0.0
        %v2188 = vadd.f32 %v2186, %v2187
        %v2189 = vsel %vm392, %v2104, 0.0
        %v2190 = vadd.f32 %v2188, %v2189
        %v2191 = vsel %vm392, %v2109, 0.0
        %v2192 = vadd.f32 %v2190, %v2191
        %v2193 = vsel %vm392, %v2114, 0.0
        %v2194 = vadd.f32 %v2192, %v2193
        %v2195 = vsel %vm392, %v2119, 0.0
        %v2196 = vadd.f32 %v2194, %v2195
        %v2197 = vsel %vm392, %v2124, 0.0
        %v2198 = vadd.f32 %v2196, %v2197
        %v2199 = vsel %vm392, %v2129, 0.0
        %v2200 = vadd.f32 %v2198, %v2199
        %v2201 = vsel %vm392, %v2134, 0.0
        %v2202 = vadd.f32 %v2200, %v2201
        %v2203 = vsel %vm392, %v2139, 0.0
        %v2204 = vadd.f32 %v2202, %v2203
        %v2205 = vrot.slane %v2204, 4
        %v2206 = vadd.f32 %v2204, %v2205
        %v2207 = vrot.slane %v2206, 2
        %v2208 = vadd.f32 %v2206, %v2207
        %v2209 = vrot.slane %v2208, 1
        %v2210 = vadd.f32 %v2208, %v2209
        %v2211 = vrcp.pop 256.0
        %v2212 = vmul.f32 %v2210, %v2211
        %v2213 = vld [vmem:[%s7] sm:$0xff]
        %v2214 = vld [vmem:[%s7 + $0x8] sm:$0xff]
        %v2216 = vsel %vm392, %v2212, 0
        %2218 = vmatprep.subr.mxu0 0.0
        %2219 = vmatpush1.msra.mxu0 0.0
        %2220 = vmatprep.subr.mxu0 0.0
        %2221 = vmatpush1.msra.mxu0 0.0
        %2222 = vmatprep.subr.mxu0 0.0
        %2223 = vmatpush1.msra.mxu0 0.0
        %2224 = vmatprep.subr.mxu0 0.0
        %2225 = vmatpush1.msra.mxu0 0.0
        %2226 = vmatprep.subr.mxu0 0.0
        %2227 = vmatpush1.msra.mxu0 0.0
        %2228 = vmatprep.subr.mxu0 0.0
        %2229 = vmatpush1.msra.mxu0 0.0
        %2230 = vmatprep.subr.mxu0 0.0
        %2231 = vmatpush1.msra.mxu0 0.0
        %2232 = vmatprep.subr.mxu0 0.0
        %2233 = vmatpush1.msra.mxu0 0.0
        %2234 = vmatprep.subr.mxu0 0.0
        %2235 = vmatpush1.msra.mxu0 0.0
        %2236 = vmatprep.subr.mxu0 0.0
        %2237 = vmatpush1.msra.mxu0 0.0
        %2238 = vmatprep.subr.mxu0 0.0
        %2239 = vmatpush1.msra.mxu0 0.0
        %2240 = vmatprep.subr.mxu0 0.0
        %2241 = vmatpush1.msra.mxu0 0.0
        %2242 = vmatprep.subr.mxu0 0.0
        %2243 = vmatpush1.msra.mxu0 0.0
        %2244 = vmatprep.subr.mxu0 0.0
        %2245 = vmatpush1.msra.mxu0 0.0
        %2246 = vmatprep.subr.mxu0 0.0
        %2247 = vmatpush1.msra.mxu0 %v2214
        %2248 = vmatprep.subr.mxu0 0.0
        %2249 = vmatpush1.msra.mxu0 %v2213
        %2250 = vmatprep.subr.mxu0 0.0
        %2251 = vmatpush2.msra.mxu0 0.0
        %2252 = vmatprep.subr.mxu0 0.0
        %2253 = vmatpush2.msra.mxu0 0.0
        %2254 = vmatprep.subr.mxu0 0.0
        %2255 = vmatpush2.msra.mxu0 0.0
        %2256 = vmatprep.subr.mxu0 0.0
        %2257 = vmatpush2.msra.mxu0 0.0
        %2258 = vmatprep.subr.mxu0 0.0
        %2259 = vmatpush2.msra.mxu0 0.0
        %2260 = vmatprep.subr.mxu0 0.0
        %2261 = vmatpush2.msra.mxu0 0.0
        %2262 = vmatprep.subr.mxu0 0.0
        %2263 = vmatpush2.msra.mxu0 0.0
        %2264 = vmatprep.subr.mxu0 0.0
        %2265 = vmatpush2.msra.mxu0 0.0
        %2266 = vmatprep.subr.mxu0 0.0
        %2267 = vmatpush2.msra.mxu0 0.0
        %2268 = vmatprep.subr.mxu0 0.0
        %2269 = vmatpush2.msra.mxu0 0.0
        %2270 = vmatprep.subr.mxu0 0.0
        %2271 = vmatpush2.msra.mxu0 0.0
        %2272 = vmatprep.subr.mxu0 0.0
        %2273 = vmatpush2.msra.mxu0 0.0
        %2274 = vmatprep.subr.mxu0 0.0
        %2275 = vmatpush2.msra.mxu0 0.0
        %2276 = vmatprep.subr.mxu0 0.0
        %2277 = vmatpush2.msra.mxu0 0.0
        %2278 = vmatprep.subr.mxu0 0.0
        %2279 = vmatpush2.msra.mxu0 0.0
        %2280 = vmatprep.subr.mxu0 0.0
        %2281 = vmatpush2.msra.mxu0 0.0
        %2282 = vmatprep.mubr.f32.mxu0 0.0
        %2283 = vmatmul.mubr.f32.gmra.mxu0 %v2216
        %v2284 = vpop.f32.mrf.mxu0
        %v2285 = vadd.f32 0.0, %v2284
        %v2286 = vpop.f32.mrf.mxu0
        %2287 = vdwg.mxu0
        %v2288 = vxor.u32 %v2285, 2147483648
        %v2289 = vmul.f32 %v2288, 1.442695
        %v2290 = vpow.pop %v2289
        %v2291 = vadd.f32 %v2290, 1.0
        %v2292 = vrcp.pop %v2291
        %v2293 = vmul.f32 1.0, %v2292
        %v2294 = vmul.f32 %v2285, %v2293
        %v2295 = vld [vmem:[%s8] sm:$0x3]
        %vm2296 = vcmask 15360
        %v2298 = vsel %vm2296, %v2294, 0
        %vm2300 = vcmask 1041408
        %v2302 = vsel %vm2300, %v2295, 0
        %2304 = vmatprep.subr.mxu0 0.0
        %2305 = vmatpush1.msra.mxu0 0.0
        %2306 = vmatprep.subr.mxu0 0.0
        %2307 = vmatpush1.msra.mxu0 0.0
        %2308 = vmatprep.subr.mxu0 0.0
        %2309 = vmatpush1.msra.mxu0 0.0
        %2310 = vmatprep.subr.mxu0 0.0
        %2311 = vmatpush1.msra.mxu0 0.0
        %2312 = vmatprep.subr.mxu0 0.0
        %2313 = vmatpush1.msra.mxu0 0.0
        %2314 = vmatprep.subr.mxu0 0.0
        %2315 = vmatpush1.msra.mxu0 0.0
        %2316 = vmatprep.subr.mxu0 0.0
        %2317 = vmatpush1.msra.mxu0 0.0
        %2318 = vmatprep.subr.mxu0 0.0
        %2319 = vmatpush1.msra.mxu0 0.0
        %2320 = vmatprep.subr.mxu0 0.0
        %2321 = vmatpush1.msra.mxu0 0.0
        %2322 = vmatprep.subr.mxu0 0.0
        %2323 = vmatpush1.msra.mxu0 0.0
        %2324 = vmatprep.subr.mxu0 0.0
        %2325 = vmatpush1.msra.mxu0 0.0
        %2326 = vmatprep.subr.mxu0 0.0
        %2327 = vmatpush1.msra.mxu0 0.0
        %2328 = vmatprep.subr.mxu0 0.0
        %2329 = vmatpush1.msra.mxu0 0.0
        %2330 = vmatprep.subr.mxu0 0.0
        %2331 = vmatpush1.msra.mxu0 0.0
        %2332 = vmatprep.subr.mxu0 0.0
        %2333 = vmatpush1.msra.mxu0 0.0
        %2334 = vmatprep.subr.mxu0 0.0
        %2335 = vmatpush1.msra.mxu0 %v2302
        %2336 = vmatprep.subr.mxu0 0.0
        %2337 = vmatpush2.msra.mxu0 0.0
        %2338 = vmatprep.subr.mxu0 0.0
        %2339 = vmatpush2.msra.mxu0 0.0
        %2340 = vmatprep.subr.mxu0 0.0
        %2341 = vmatpush2.msra.mxu0 0.0
        %2342 = vmatprep.subr.mxu0 0.0
        %2343 = vmatpush2.msra.mxu0 0.0
        %2344 = vmatprep.subr.mxu0 0.0
        %2345 = vmatpush2.msra.mxu0 0.0
        %2346 = vmatprep.subr.mxu0 0.0
        %2347 = vmatpush2.msra.mxu0 0.0
        %2348 = vmatprep.subr.mxu0 0.0
        %2349 = vmatpush2.msra.mxu0 0.0
        %2350 = vmatprep.subr.mxu0 0.0
        %2351 = vmatpush2.msra.mxu0 0.0
        %2352 = vmatprep.subr.mxu0 0.0
        %2353 = vmatpush2.msra.mxu0 0.0
        %2354 = vmatprep.subr.mxu0 0.0
        %2355 = vmatpush2.msra.mxu0 0.0
        %2356 = vmatprep.subr.mxu0 0.0
        %2357 = vmatpush2.msra.mxu0 0.0
        %2358 = vmatprep.subr.mxu0 0.0
        %2359 = vmatpush2.msra.mxu0 0.0
        %2360 = vmatprep.subr.mxu0 0.0
        %2361 = vmatpush2.msra.mxu0 0.0
        %2362 = vmatprep.subr.mxu0 0.0
        %2363 = vmatpush2.msra.mxu0 0.0
        %2364 = vmatprep.subr.mxu0 0.0
        %2365 = vmatpush2.msra.mxu0 0.0
        %2366 = vmatprep.subr.mxu0 0.0
        %2367 = vmatpush2.msra.mxu0 0.0
        %2368 = vmatprep.mubr.f32.mxu0 0.0
        %2369 = vmatmul.mubr.f32.gmra.mxu0 %v2298
        %v2370 = vpop.f32.mrf.mxu0
        %v2371 = vadd.f32 0.0, %v2370
        %v2372 = vpop.f32.mrf.mxu0
        %2373 = vdwg.mxu0
        %v2374 = vxor.u32 %v2371, 2147483648
        %v2375 = vmul.f32 %v2374, 1.442695
        %v2376 = vpow.pop %v2375
        %v2377 = vadd.f32 %v2376, 1.0
        %v2378 = vrcp.pop %v2377
        %v2379 = vmul.f32 1.0, %v2378
        %v2380 = vlaneseq
        %v2381 = vshrl.u32 %v2380, 7
        %v2382 = vsub.s32 0, %v2381
        %v2383 = vrot.slane %v2379, %v2382
        %v2384 = vmul.f32 %v1984, %v2383
        %v2385 = vmul.f32 %v1989, %v2383
        %v2386 = vmul.f32 %v1994, %v2383
        %v2387 = vmul.f32 %v1999, %v2383
        %v2388 = vmul.f32 %v2004, %v2383
        %v2389 = vmul.f32 %v2009, %v2383
        %v2390 = vmul.f32 %v2014, %v2383
        %v2391 = vmul.f32 %v2019, %v2383
        %v2392 = vmul.f32 %v2024, %v2383
        %v2393 = vmul.f32 %v2029, %v2383
        %v2394 = vmul.f32 %v2034, %v2383
        %v2395 = vmul.f32 %v2039, %v2383
        %v2396 = vmul.f32 %v2044, %v2383
        %v2397 = vmul.f32 %v2049, %v2383
        %v2398 = vmul.f32 %v2054, %v2383
        %v2399 = vmul.f32 %v2059, %v2383
        %v2400 = vmul.f32 %v2064, %v2383
        %v2401 = vmul.f32 %v2069, %v2383
        %v2402 = vmul.f32 %v2074, %v2383
        %v2403 = vmul.f32 %v2079, %v2383
        %v2404 = vmul.f32 %v2084, %v2383
        %v2405 = vmul.f32 %v2089, %v2383
        %v2406 = vmul.f32 %v2094, %v2383
        %v2407 = vmul.f32 %v2099, %v2383
        %v2408 = vmul.f32 %v2104, %v2383
        %v2409 = vmul.f32 %v2109, %v2383
        %v2410 = vmul.f32 %v2114, %v2383
        %v2411 = vmul.f32 %v2119, %v2383
        %v2412 = vmul.f32 %v2124, %v2383
        %v2413 = vmul.f32 %v2129, %v2383
        %v2414 = vmul.f32 %v2134, %v2383
        %v2415 = vmul.f32 %v2139, %v2383
        %v2416 = vadd.f32 %v351, %v2384
        %v2417 = vadd.f32 %v352, %v2385
        %v2418 = vadd.f32 %v353, %v2386
        %v2419 = vadd.f32 %v354, %v2387
        %v2420 = vadd.f32 %v355, %v2388
        %v2421 = vadd.f32 %v356, %v2389
        %v2422 = vadd.f32 %v357, %v2390
        %v2423 = vadd.f32 %v358, %v2391
        %v2424 = vadd.f32 %v359, %v2392
        %v2425 = vadd.f32 %v360, %v2393
        %v2426 = vadd.f32 %v361, %v2394
        %v2427 = vadd.f32 %v362, %v2395
        %v2428 = vadd.f32 %v363, %v2396
        %v2429 = vadd.f32 %v364, %v2397
        %v2430 = vadd.f32 %v365, %v2398
        %v2431 = vadd.f32 %v366, %v2399
        %v2432 = vadd.f32 %v367, %v2400
        %v2433 = vadd.f32 %v368, %v2401
        %v2434 = vadd.f32 %v369, %v2402
        %v2435 = vadd.f32 %v370, %v2403
        %v2436 = vadd.f32 %v371, %v2404
        %v2437 = vadd.f32 %v372, %v2405
        %v2438 = vadd.f32 %v373, %v2406
        %v2439 = vadd.f32 %v374, %v2407
        %v2440 = vadd.f32 %v375, %v2408
        %v2441 = vadd.f32 %v376, %v2409
        %v2442 = vadd.f32 %v377, %v2410
        %v2443 = vadd.f32 %v378, %v2411
        %v2444 = vadd.f32 %v379, %v2412
        %v2445 = vadd.f32 %v380, %v2413
        %v2446 = vadd.f32 %v381, %v2414
        %v2447 = vadd.f32 %v382, %v2415
        %v2448 = vmax.f32 %v2416, 0.0
        %v2449 = vmax.f32 %v2417, 0.0
        %v2450 = vmax.f32 %v2418, 0.0
        %v2451 = vmax.f32 %v2419, 0.0
        %v2452 = vmax.f32 %v2420, 0.0
        %v2453 = vmax.f32 %v2421, 0.0
        %v2454 = vmax.f32 %v2422, 0.0
        %v2455 = vmax.f32 %v2423, 0.0
        %v2456 = vmax.f32 %v2424, 0.0
        %v2457 = vmax.f32 %v2425, 0.0
        %v2458 = vmax.f32 %v2426, 0.0
        %v2459 = vmax.f32 %v2427, 0.0
        %v2460 = vmax.f32 %v2428, 0.0
        %v2461 = vmax.f32 %v2429, 0.0
        %v2462 = vmax.f32 %v2430, 0.0
        %v2463 = vmax.f32 %v2431, 0.0
        %v2464 = vmax.f32 %v2432, 0.0
        %v2465 = vmax.f32 %v2433, 0.0
        %v2466 = vmax.f32 %v2434, 0.0
        %v2467 = vmax.f32 %v2435, 0.0
        %v2468 = vmax.f32 %v2436, 0.0
        %v2469 = vmax.f32 %v2437, 0.0
        %v2470 = vmax.f32 %v2438, 0.0
        %v2471 = vmax.f32 %v2439, 0.0
        %v2472 = vmax.f32 %v2440, 0.0
        %v2473 = vmax.f32 %v2441, 0.0
        %v2474 = vmax.f32 %v2442, 0.0
        %v2475 = vmax.f32 %v2443, 0.0
        %v2476 = vmax.f32 %v2444, 0.0
        %v2477 = vmax.f32 %v2445, 0.0
        %v2478 = vmax.f32 %v2446, 0.0
        %v2479 = vmax.f32 %v2447, 0.0
        %2480 = vst.msk [vmem:[%s350] sm:$0xff] %vm392, %v2448
        %2481 = vst.msk [vmem:[%s350 + $0x8] sm:$0xff] %vm392, %v2449
        %2482 = vst.msk [vmem:[%s350 + $0x10] sm:$0xff] %vm392, %v2450
        %2483 = vst.msk [vmem:[%s350 + $0x18] sm:$0xff] %vm392, %v2451
        %2484 = vst.msk [vmem:[%s350 + $0x20] sm:$0xff] %vm392, %v2452
        %2485 = vst.msk [vmem:[%s350 + $0x28] sm:$0xff] %vm392, %v2453
        %2486 = vst.msk [vmem:[%s350 + $0x30] sm:$0xff] %vm392, %v2454
        %2487 = vst.msk [vmem:[%s350 + $0x38] sm:$0xff] %vm392, %v2455
        %2488 = vst.msk [vmem:[%s350 + $0x40] sm:$0xff] %vm392, %v2456
        %2489 = vst.msk [vmem:[%s350 + $0x48] sm:$0xff] %vm392, %v2457
        %2490 = vst.msk [vmem:[%s350 + $0x50] sm:$0xff] %vm392, %v2458
        %2491 = vst.msk [vmem:[%s350 + $0x58] sm:$0xff] %vm392, %v2459
        %2492 = vst.msk [vmem:[%s350 + $0x60] sm:$0xff] %vm392, %v2460
        %2493 = vst.msk [vmem:[%s350 + $0x68] sm:$0xff] %vm392, %v2461
        %2494 = vst.msk [vmem:[%s350 + $0x70] sm:$0xff] %vm392, %v2462
        %2495 = vst.msk [vmem:[%s350 + $0x78] sm:$0xff] %vm392, %v2463
        %2496 = vst.msk [vmem:[%s350 + $0x80] sm:$0xff] %vm392, %v2464
        %2497 = vst.msk [vmem:[%s350 + $0x88] sm:$0xff] %vm392, %v2465
        %2498 = vst.msk [vmem:[%s350 + $0x90] sm:$0xff] %vm392, %v2466
        %2499 = vst.msk [vmem:[%s350 + $0x98] sm:$0xff] %vm392, %v2467
        %2500 = vst.msk [vmem:[%s350 + $0xa0] sm:$0xff] %vm392, %v2468
        %2501 = vst.msk [vmem:[%s350 + $0xa8] sm:$0xff] %vm392, %v2469
        %2502 = vst.msk [vmem:[%s350 + $0xb0] sm:$0xff] %vm392, %v2470
        %2503 = vst.msk [vmem:[%s350 + $0xb8] sm:$0xff] %vm392, %v2471
        %2504 = vst.msk [vmem:[%s350 + $0xc0] sm:$0xff] %vm392, %v2472
        %2505 = vst.msk [vmem:[%s350 + $0xc8] sm:$0xff] %vm392, %v2473
        %2506 = vst.msk [vmem:[%s350 + $0xd0] sm:$0xff] %vm392, %v2474
        %2507 = vst.msk [vmem:[%s350 + $0xd8] sm:$0xff] %vm392, %v2475
        %2508 = vst.msk [vmem:[%s350 + $0xe0] sm:$0xff] %vm392, %v2476
        %2509 = vst.msk [vmem:[%s350 + $0xe8] sm:$0xff] %vm392, %v2477
        %2510 = vst.msk [vmem:[%s350 + $0xf0] sm:$0xff] %vm392, %v2478
        %2511 = vst.msk [vmem:[%s350 + $0xf8] sm:$0xff] %vm392, %v2479
        %s2512 = sand.u32 %s228, 1
        %s2513 = scalar_lea.sflag [#allocation5], %s2512
        %s2514 = sand.u32 %s228, 1
        %s2515 = smul.addr %s2514, 256
        %s2516 = scalar_lea.vmem [#allocation6], %s2515
        // Predicated region
        $region61: #{tpu_custom_call.1} parent=55 // pred_check
          %p2517 = pneg %p238
        $region62: #{tpu_custom_call.1} parent=55 // pred_check_branch
          %2519 = sbr.rel (%p2517) target = $region64
        $region63: #{tpu_custom_call.1} parent=55 // pred_region
          %s2521 = ssub.s32 4096, 4096
          %2522 = vsyncadd %s2513, %s2521
          %s2523 = smul.addr %s26, 32
          %s2524 = smul.addr %s2523, 128
          %s2525 = scalar_lea.hbm %s9, %s2524
          %s2526 = sshll.u32 %s2516, 4
          %s2527 = int_to_ptr.vmem [resolvable:$true] %s2526
          %2532 = dma.vmem_to_hbm [thread:$0]  %s2527, 4096, %s2525, %s2513, 128, 128, 8
        $region64: #{tpu_custom_call.1} parent=55 // pred_fallthru
          _
      $region56: #{tpu_custom_call.1} parent=5 // pred_fallthru
        _
      %p2533 = scmp.le.s32.totalorder 2, %s21
      // Predicated region
      $region65: #{tpu_custom_call.1} parent=5 // pred_check
        %p2534 = pneg %p2533
      $region66: #{tpu_custom_call.1} parent=5 // pred_check_branch
        %2536 = sbr.rel (%p2534) target = $region68
      $region67: #{tpu_custom_call.1} parent=5 // pred_region
        %s2537 = ssub.s32 %s21, 2
        // Predicated region
        $region69: #{tpu_custom_call.1} parent=67 // pred_check
          %p2538 = pneg %p244
        $region70: #{tpu_custom_call.1} parent=67 // pred_check_branch
          %2540 = sbr.rel (%p2538) target = $region72
        $region71: #{tpu_custom_call.1} parent=67 // pred_region
          %s2541 = sand.u32 %s229, 1
          %s2542 = scalar_lea.sflag [#allocation5], %s2541
          %s2543 = sand.u32 %s229, 1
          %s2544 = smul.addr %s2543, 256
          %s2545 = scalar_lea.vmem [#allocation6], %s2544
          %2546 = dma.done %s2542, 4096
        $region72: #{tpu_custom_call.1} parent=67 // pred_fallthru
          _
      $region68: #{tpu_custom_call.1} parent=5 // pred_fallthru
        _
    $region6: #{tpu_custom_call.1} parent=1 // loop_footer
      %s25 = sadd.s32 1, %s21
    $region7: #{tpu_custom_call.1} parent=1 // loop_footer_branch
      %20 = sbr.rel target = $region3
    $region8: #{tpu_custom_call.1} parent=1 // loop_exit
      _
    %2547 = vsyncpa [#allocation4], 1
    %s2548 = scalar_lea.sflag [#allocation4], 1
    %2549 = vsyncpa %s2548, 1
    %2550 = vsyncpa [#allocation5], 1
    %s2551 = scalar_lea.sflag [#allocation5], 1
    %2552 = vsyncpa %s2551, 1

</llo_original>
